<compile_context>
chip_gen: v6e
topology: v6e:2x2x1
jax: 0.10.0
libtpu: 0.0.40
codegen_flags: <defaults>
</compile_context>

<pallas_src>
import functools
import math

import numpy as np
import jax
import jax.numpy as jnp
from jax.experimental import pallas as pl
from jax.experimental.pallas import tpu as pltpu


# ---------------------------------------------------------------------------
# Gabor filter math (exactly mirrors the torch module's forward()); used both
# inside the fused conv kernel and by the standalone bank-extraction kernel.
# All operands are laid out (O, KK*C) / (1, KK*C) so the result is already in
# the big-dot weight layout w[o, kk*C + c].
# ---------------------------------------------------------------------------
def _gabor_bank_ops(sigma, theta, lamda, gamma, psi, xg, yg):
    sigma_x = sigma
    sigma_y = sigma / gamma
    ct = jnp.cos(theta - math.pi)
    st = jnp.sin(theta - math.pi)
    rot_x = xg * ct + yg * st
    rot_y = -xg * st + yg * ct
    g = jnp.exp(-0.5 * (rot_x * rot_x / (sigma_x * sigma_x) +
                        rot_y * rot_y / (sigma_y * sigma_y)))
    g = g / (2.0 * math.pi * sigma_x * sigma_y)
    return g * jnp.cos(2.0 * math.pi / lamda * rot_x + psi)


def _bank_inputs(sigma, theta, lamda, gamma, psi, ksp):
    """Pre-tiled parameter / coordinate arrays for the (O, KK*C) bank layout."""
    O, C = sigma.shape
    KK = ksp * ksp
    half = (ksp - 1) // 2
    coords = jnp.arange(-half, half + 1, dtype=jnp.float32)
    # np.mgrid[-h:h+1, -h:h+1]: y varies along rows (kh), x along columns (kw).
    Y, X = jnp.meshgrid(coords, coords, indexing="ij")
    xg = jnp.repeat(X.reshape(-1), C).reshape(1, KK * C)   # [0, kk*C+c] = x(kw)
    yg = jnp.repeat(Y.reshape(-1), C).reshape(1, KK * C)   # [0, kk*C+c] = y(kh)
    tile = lambda p: jnp.tile(p.astype(jnp.float32), (1, KK))  # [o,kk*C+c]=p[o,c]
    return tuple(tile(p) for p in (sigma, theta, lamda, gamma, psi)) + (xg, yg)


# ---------------------------------------------------------------------------
# Standalone bank-extraction kernel (debug / validation only; the forward path
# computes the bank inside the conv kernel with the very same _gabor_bank_ops).
# ---------------------------------------------------------------------------
def _gabor_bank_kernel(sig_ref, th_ref, lam_ref, gam_ref, psi_ref,
                       xg_ref, yg_ref, w_ref):
    w_ref[...] = _gabor_bank_ops(sig_ref[...], th_ref[...], lam_ref[...],
                                 gam_ref[...], psi_ref[...],
                                 xg_ref[...], yg_ref[...])


def pallas_gabor_bank(sigma, theta, lamda, gamma, psi, kernel_size):
    """Gabor bank (O, KK*C) f32, w[o, (kh*ksp+kw)*C + c]."""
    O, C = sigma.shape
    half = int(math.floor(kernel_size / 2))
    ksp = 2 * half + 1
    KK = ksp * ksp
    args = _bank_inputs(sigma, theta, lamda, gamma, psi, ksp)
    return pl.pallas_call(
        _gabor_bank_kernel,
        out_shape=jax.ShapeDtypeStruct((O, KK * C), jnp.float32),
    )(*args)


# ---------------------------------------------------------------------------
# Fused kernel: Gabor-bank generation + im2col staging + one fat conv matmul
# + bias + in-kernel crop, nb samples per grid step.
# ---------------------------------------------------------------------------
def _gabor_conv_kernel(sig_ref, th_ref, lam_ref, gam_ref, psi_ref,
                       xg_ref, yg_ref, x_ref, b_ref, o_ref, xcol_ref, *,
                       ksp, dil, wp, ow1, row_stride, nb, c, compute_dtype):
    # Gabor bank (O, KK*C): recomputed every grid step (tiny EUP/VPU work),
    # emitted straight in the MXU compute dtype -> no weight HBM round trip.
    w = _gabor_bank_ops(sig_ref[...], th_ref[...], lam_ref[...], gam_ref[...],
                        psi_ref[...], xg_ref[...], yg_ref[...]
                        ).astype(compute_dtype)

    m = xcol_ref.shape[1]                       # OH1 * Wp flattened positions
    oh1 = m // wp
    bias = b_ref[...]                           # (O, 1) f32
    for n in range(nb):                         # nb small -> unrolled at trace
        # Fused im2col: the KK shifted (C, M) views of the flat padded image
        # are staged once into the (KK*C, M) VMEM scratch ...
        for kh in range(ksp):
            for kw in range(ksp):
                kk = kh * ksp + kw
                shift = (kh * wp + kw) * dil
                xcol_ref[kk * c:(kk + 1) * c, :] = x_ref[n, :, shift:shift + m]
        # ... so the whole conv is ONE dot with contraction K = KK*C:
        # accumulation stays inside the MXU, accumulator written once.
        acc = jnp.dot(w, xcol_ref[...], preferred_element_type=jnp.float32)
        res = acc + bias                                        # fused bias
        # In-kernel crop of the Wp-stride garbage columns (+ row stride):
        # only valid columns are written, lane-dense, -> no wrapper-side copy.
        # TODO(synk): switch to a fori_loop row store for very large OH1.
        out_r = 0
        for oh in range(0, oh1, row_stride):
            o_ref[n, :, out_r * ow1:(out_r + 1) * ow1] = (
                res[:, oh * wp:oh * wp + ow1].astype(o_ref.dtype))
            out_r += 1


# ---------------------------------------------------------------------------
# Public forward: matches Gabor2D.forward(input).  NCHW in, NCHW out.
# ---------------------------------------------------------------------------
def gabor2d_forward(x, sigma, theta, lamda, gamma, psi, *,
                    kernel_size, stride=1, padding=0, dilation=1, bias=None,
                    out_dtype=None, compute_dtype=jnp.bfloat16):
    O, C = sigma.shape
    N, Cx, H, W = x.shape
    assert Cx == C
    out_dtype = x.dtype if out_dtype is None else out_dtype

    # Note: for even kernel_size the torch module builds a (k+1)x(k+1) kernel
    # (np.mgrid[-floor(k/2):floor(k/2)+1]); ksp mirrors that exactly.
    half = int(math.floor(kernel_size / 2))
    ksp = 2 * half + 1
    KK = ksp * ksp
    d = dilation

    Hp, Wp = H + 2 * padding, W + 2 * padding
    OH1, OW1 = Hp - d * (ksp - 1), Wp - d * (ksp - 1)     # stride-1 output size
    assert OH1 > 0 and OW1 > 0
    OHs = (OH1 - 1) // stride + 1                          # torch output size
    OWs = (OW1 - 1) // stride + 1

    # Pad spatially (plus a few trailing zero rows so every shifted flat slice
    # stays in bounds) and flatten H,W -> L.
    # TODO(synk): fold the pad + compute-dtype cast into the kernel (zero-halo
    # VMEM scratch) to save this one extra input HBM round trip.
    extra = d * (ksp - 1)
    extra_rows = -(-extra // Wp) if extra > 0 else 0
    x_pad = jnp.pad(x.astype(compute_dtype),
                    ((0, 0), (0, 0),
                     (padding, padding + extra_rows), (padding, padding)))
    L = (Hp + extra_rows) * Wp
    x_flat = x_pad.reshape(N, C, L)                        # contiguous -> free
    M = OH1 * Wp                                           # flat window width

    params = _bank_inputs(sigma, theta, lamda, gamma, psi, ksp)  # 5 + xg + yg
    b = bias if bias is not None else jnp.zeros((O,), jnp.float32)
    b = b.astype(jnp.float32).reshape(O, 1)

    out_cols = OHs * OW1
    csz = np.dtype(compute_dtype).itemsize
    osz = np.dtype(out_dtype).itemsize

    # --- batch blocking: nb samples per grid step, >= 2 steps when N >= 2 ----
    per_sample = 2 * C * L * csz + 2 * O * out_cols * osz   # double-buffered
    fixed = (KK * C * M * csz                               # xcol scratch
             + 2 * (5 * O * KK * C * 4 + 2 * KK * C * 4 + O * 4))
    budget = 20 * 2 ** 20
    nb = 1
    for cand in range(1, N + 1):
        if N % cand:
            continue
        if N >= 2 and N // cand < 2:
            continue                                        # keep >= 2 steps
        if fixed + cand * per_sample <= budget:
            nb = cand
    # TODO(synk): spatial (OH row-block + halo) tiling when a single sample
    # exceeds the budget (needed for very large C*H*W on v7x's 64 MiB VMEM).
    steps = N // nb

    vmem_limit = int(min(48 * 2 ** 20,
                         max(32 * 2 ** 20, 2 * (fixed + nb * per_sample))))

    kern = functools.partial(_gabor_conv_kernel, ksp=ksp, dil=d, wp=Wp,
                             ow1=OW1, row_stride=stride, nb=nb, c=C,
                             compute_dtype=compute_dtype)

    param_spec = pl.BlockSpec((O, KK * C), lambda i: (0, 0))
    coord_spec = pl.BlockSpec((1, KK * C), lambda i: (0, 0))
    in_specs = ([param_spec] * 5 + [coord_spec, coord_spec] +
                [pl.BlockSpec((nb, C, L), lambda i: (i, 0, 0)),
                 pl.BlockSpec((O, 1), lambda i: (0, 0))])
    out_spec = pl.BlockSpec((nb, O, out_cols), lambda i: (i, 0, 0))

    cost = pl.CostEstimate(
        flops=2 * N * M * C * O * KK,
        transcendentals=steps * O * KK * C * 4,
        bytes_accessed=N * C * L * csz + N * O * out_cols * osz
                       + steps * 7 * KK * C * O * 4)

    def _run(sem):
        return pl.pallas_call(
            kern,
            out_shape=jax.ShapeDtypeStruct((N, O, out_cols), out_dtype),
            grid=(steps,),
            in_specs=in_specs,
            out_specs=out_spec,
            scratch_shapes=[pltpu.VMEM((KK * C, M), compute_dtype)],
            compiler_params=pltpu.CompilerParams(
                dimension_semantics=(sem,),
                vmem_limit_bytes=vmem_limit),
            cost_estimate=cost,
        )(*params, x_flat, b)

    # v7x: CORE_PARALLEL actually shards grid steps across the 2 TensorCores;
    # on single-core generations plain "parallel" is used (measured no-op vs
    # "arbitrary" anyway).  Fall back automatically if unsupported.
    sem_candidates = ["parallel"]
    if steps >= 2 and hasattr(pltpu, "CORE_PARALLEL"):
        try:
            kind = jax.devices()[0].device_kind.lower()
        except Exception:
            kind = ""
        if "v7" in kind:
            sem_candidates.insert(0, pltpu.CORE_PARALLEL)

    out_flat, err = None, None
    for sem in sem_candidates:
        try:
            out_flat = _run(sem)
            break
        except Exception as e:          # fall back to the portable semantics
            err = e
    if out_flat is None:
        raise err

    out = out_flat.reshape(N, O, OHs, OW1)          # contiguous split -> free
    if stride > 1:
        # Rows are already strided in-kernel; only the (much smaller) column
        # subsample remains wrapper-side.
        # TODO(synk): column-strided staging in-kernel to remove this too.
        out = out[:, :, :, ::stride]
        assert out.shape == (N, O, OHs, OWs)
    return out


# ---------------------------------------------------------------------------
# Independent (pure-jnp) re-implementation of the torch module's filter math,
# used only as the reference in __main__ (OIHW layout, like F.conv2d expects).
# ---------------------------------------------------------------------------
def gabor_bank_reference(sigma, theta, lamda, gamma, psi, kernel_size):
    half = int(math.floor(kernel_size / 2))
    coords = jnp.arange(-half, half + 1, dtype=jnp.float32)
    Y, X = jnp.meshgrid(coords, coords, indexing="ij")     # == np.mgrid[y, x]
    ct = jnp.cos(theta - math.pi)[..., None, None]
    st = jnp.sin(theta - math.pi)[..., None, None]
    sx = sigma[..., None, None]
    sy = (sigma / gamma)[..., None, None]
    rot_x = X * ct + Y * st
    rot_y = -X * st + Y * ct
    g = jnp.exp(-0.5 * (rot_x ** 2 / sx ** 2 + rot_y ** 2 / sy ** 2))
    g = g / (2.0 * math.pi * sx * sy)
    g = g * jnp.cos(2.0 * math.pi / lamda[..., None, None] * rot_x
                    + psi[..., None, None])
    return g                                                 # (O, C, ksp, ksp)


if __name__ == "__main__":
    # Module config (bias=False, the module default).
    in_channels, out_channels = 4, 8
    kernel_size, stride, padding, dilation = 3, 1, 1, 1

    key = jax.random.PRNGKey(0)
    ks = jax.random.split(key, 6)
    # Deterministic parameter init mirroring reset_parameters():
    sigma = 5.0 + 1.5 * jax.random.normal(ks[0], (out_channels, in_channels), jnp.float32)
    theta = jax.random.uniform(ks[1], (out_channels, in_channels), jnp.float32)
    lamda = 5.0 + 1.5 * jax.random.normal(ks[2], (out_channels, in_channels), jnp.float32)
    gamma = 1.5 + 0.4 * jax.random.normal(ks[3], (out_channels, in_channels), jnp.float32)
    psi = jax.random.uniform(ks[4], (out_channels, in_channels), jnp.float32)

    x = jax.random.normal(ks[5], (2, in_channels, 16, 16), jnp.float32)   # NCHW

    out = gabor2d_forward(x, sigma, theta, lamda, gamma, psi,
                          kernel_size=kernel_size, stride=stride,
                          padding=padding, dilation=dilation, bias=None)
    out = jax.block_until_ready(out)

    # 1) Validate the Pallas Gabor bank against an independent re-implementation
    #    of the torch formula (checks theta-pi rotation, rot_y sign, the
    #    1/(2*pi*sx*sy) normalization, the psi phase and mgrid orientation).
    half = int(math.floor(kernel_size / 2))
    ksp = 2 * half + 1
    KK = ksp * ksp
    ref_bank = gabor_bank_reference(sigma, theta, lamda, gamma, psi, kernel_size)
    ref_bank_flat = ref_bank.transpose(0, 2, 3, 1).reshape(out_channels, KK * in_channels)
    pallas_bank = pallas_gabor_bank(sigma, theta, lamda, gamma, psi, kernel_size)
    assert jnp.allclose(pallas_bank, ref_bank_flat, rtol=5e-3, atol=1e-5)

    # 2) Validate the conv output against XLA conv using the *independent* bank.
    conv = functools.partial(
        jax.lax.conv_general_dilated,
        window_strides=(stride, stride),
        padding=[(padding, padding), (padding, padding)],
        rhs_dilation=(dilation, dilation),
        dimension_numbers=("NCHW", "OIHW", "NCHW"))

    # Matched-precision reference (bf16 operands, f32 accumulation).
    ref_bf16 = conv(x.astype(jnp.bfloat16), ref_bank.astype(jnp.bfloat16),
                    preferred_element_type=jnp.float32)
    # Full-f32 reference (difference is only bf16 operand rounding).
    ref_f32 = conv(x, ref_bank)

    assert out.shape == ref_f32.shape == (2, out_channels, 16, 16)
    assert out.dtype == x.dtype
    assert jnp.allclose(out, ref_bf16, rtol=3e-2, atol=3e-3)
    assert jnp.allclose(out, ref_f32, rtol=1e-1, atol=3e-2)

    print("KERNEL_OK")
</pallas_src>

<mosaic_0001>
module attributes {stable_mosaic.version = 11 : i64} {
  func.func @_gabor_conv_kernel(%arg0: i32, %arg1: memref<8x36xf32, #tpu.memory_space<vmem>>, %arg2: memref<8x36xf32, #tpu.memory_space<vmem>>, %arg3: memref<8x36xf32, #tpu.memory_space<vmem>>, %arg4: memref<8x36xf32, #tpu.memory_space<vmem>>, %arg5: memref<8x36xf32, #tpu.memory_space<vmem>>, %arg6: memref<1x36xf32, #tpu.memory_space<vmem>>, %arg7: memref<1x36xf32, #tpu.memory_space<vmem>>, %arg8: memref<1x4x342xbf16, #tpu.memory_space<vmem>>, %arg9: memref<8x1xf32, #tpu.memory_space<vmem>>, %arg10: memref<1x8x256xf32, #tpu.memory_space<vmem>>, %arg11: memref<36x288xbf16, #tpu.memory_space<vmem>>) attributes {dimension_semantics = [#tpu.dimension_semantics<parallel>], iteration_bounds = array<i64: 2>, scalar_prefetch = 0 : i64, scratch_operands = 1 : i64, tpu.core_type = #tpu.core_type<tc>, window_params = [{pipeline_mode = #tpu.pipeline_mode<synchronous>, transform_indices = @transform_0, window_bounds = array<i64: 8, 36>}, {pipeline_mode = #tpu.pipeline_mode<synchronous>, transform_indices = @transform_1, window_bounds = array<i64: 8, 36>}, {pipeline_mode = #tpu.pipeline_mode<synchronous>, transform_indices = @transform_2, window_bounds = array<i64: 8, 36>}, {pipeline_mode = #tpu.pipeline_mode<synchronous>, transform_indices = @transform_3, window_bounds = array<i64: 8, 36>}, {pipeline_mode = #tpu.pipeline_mode<synchronous>, transform_indices = @transform_4, window_bounds = array<i64: 8, 36>}, {pipeline_mode = #tpu.pipeline_mode<synchronous>, transform_indices = @transform_5, window_bounds = array<i64: 1, 36>}, {pipeline_mode = #tpu.pipeline_mode<synchronous>, transform_indices = @transform_6, window_bounds = array<i64: 1, 36>}, {transform_indices = @transform_7, window_bounds = array<i64: 1, 4, 342>}, {pipeline_mode = #tpu.pipeline_mode<synchronous>, transform_indices = @transform_8, window_bounds = array<i64: 8, 1>}, {transform_indices = @transform_9, window_bounds = array<i64: 1, 8, 256>}]} {
    %c0 = arith.constant 0 : index
    %c0_0 = arith.constant 0 : index
    %0 = vector.load %arg1[%c0, %c0_0] : memref<8x36xf32, #tpu.memory_space<vmem>>, vector<8x36xf32>
    %c0_1 = arith.constant 0 : index
    %c0_2 = arith.constant 0 : index
    %1 = vector.load %arg2[%c0_1, %c0_2] : memref<8x36xf32, #tpu.memory_space<vmem>>, vector<8x36xf32>
    %c0_3 = arith.constant 0 : index
    %c0_4 = arith.constant 0 : index
    %2 = vector.load %arg3[%c0_3, %c0_4] : memref<8x36xf32, #tpu.memory_space<vmem>>, vector<8x36xf32>
    %c0_5 = arith.constant 0 : index
    %c0_6 = arith.constant 0 : index
    %3 = vector.load %arg4[%c0_5, %c0_6] : memref<8x36xf32, #tpu.memory_space<vmem>>, vector<8x36xf32>
    %c0_7 = arith.constant 0 : index
    %c0_8 = arith.constant 0 : index
    %4 = vector.load %arg5[%c0_7, %c0_8] : memref<8x36xf32, #tpu.memory_space<vmem>>, vector<8x36xf32>
    %c0_9 = arith.constant 0 : index
    %c0_10 = arith.constant 0 : index
    %5 = vector.load %arg6[%c0_9, %c0_10] : memref<1x36xf32, #tpu.memory_space<vmem>>, vector<1x36xf32>
    %c0_11 = arith.constant 0 : index
    %c0_12 = arith.constant 0 : index
    %6 = vector.load %arg7[%c0_11, %c0_12] : memref<1x36xf32, #tpu.memory_space<vmem>>, vector<1x36xf32>
    %7 = arith.divf %0, %3 : vector<8x36xf32>
    %cst = arith.constant 3.14159274 : f32
    %8 = vector.broadcast %cst : f32 to vector<8x36xf32>
    %9 = arith.subf %1, %8 : vector<8x36xf32>
    %10 = math.cos %9 : vector<8x36xf32>
    %cst_13 = arith.constant 3.14159274 : f32
    %11 = vector.broadcast %cst_13 : f32 to vector<8x36xf32>
    %12 = arith.subf %1, %11 : vector<8x36xf32>
    %13 = math.sin %12 : vector<8x36xf32>
    %14 = vector.broadcast %5 : vector<1x36xf32> to vector<8x36xf32>
    %15 = arith.mulf %14, %10 : vector<8x36xf32>
    %16 = vector.broadcast %6 : vector<1x36xf32> to vector<8x36xf32>
    %17 = arith.mulf %16, %13 : vector<8x36xf32>
    %18 = arith.addf %15, %17 : vector<8x36xf32>
    %cst_14 = arith.constant 0.000000e+00 : f32
    %19 = vector.broadcast %cst_14 : f32 to vector<1x36xf32>
    %20 = arith.subf %19, %5 : vector<1x36xf32>
    %21 = vector.broadcast %20 : vector<1x36xf32> to vector<8x36xf32>
    %22 = arith.mulf %21, %13 : vector<8x36xf32>
    %23 = vector.broadcast %6 : vector<1x36xf32> to vector<8x36xf32>
    %24 = arith.mulf %23, %10 : vector<8x36xf32>
    %25 = arith.addf %22, %24 : vector<8x36xf32>
    %26 = arith.mulf %18, %18 : vector<8x36xf32>
    %27 = arith.mulf %0, %0 : vector<8x36xf32>
    %28 = arith.divf %26, %27 : vector<8x36xf32>
    %29 = arith.mulf %25, %25 : vector<8x36xf32>
    %30 = arith.mulf %7, %7 : vector<8x36xf32>
    %31 = arith.divf %29, %30 : vector<8x36xf32>
    %32 = arith.addf %28, %31 : vector<8x36xf32>
    %cst_15 = arith.constant -5.000000e-01 : f32
    %33 = vector.broadcast %cst_15 : f32 to vector<8x36xf32>
    %34 = arith.mulf %33, %32 : vector<8x36xf32>
    %35 = math.exp %34 : vector<8x36xf32>
    %cst_16 = arith.constant 6.28318548 : f32
    %36 = vector.broadcast %cst_16 : f32 to vector<8x36xf32>
    %37 = arith.mulf %36, %0 : vector<8x36xf32>
    %38 = arith.mulf %37, %7 : vector<8x36xf32>
    %39 = arith.divf %35, %38 : vector<8x36xf32>
    %cst_17 = arith.constant 6.28318548 : f32
    %40 = vector.broadcast %cst_17 : f32 to vector<8x36xf32>
    %41 = arith.divf %40, %2 : vector<8x36xf32>
    %42 = arith.mulf %41, %18 : vector<8x36xf32>
    %43 = arith.addf %42, %4 : vector<8x36xf32>
    %44 = math.cos %43 : vector<8x36xf32>
    %45 = arith.mulf %39, %44 : vector<8x36xf32>
    %46 = arith.truncf %45 : vector<8x36xf32> to vector<8x36xbf16>
    %c0_18 = arith.constant 0 : index
    %c0_19 = arith.constant 0 : index
    %47 = vector.load %arg9[%c0_18, %c0_19] : memref<8x1xf32, #tpu.memory_space<vmem>>, vector<8x1xf32>
    %c0_20 = arith.constant 0 : index
    %c0_21 = arith.constant 0 : index
    %c0_22 = arith.constant 0 : index
    %48 = vector.load %arg8[%c0_20, %c0_21, %c0_22] : memref<1x4x342xbf16, #tpu.memory_space<vmem>>, vector<1x4x288xbf16>
    %49 = vector.shape_cast %48 : vector<1x4x288xbf16> to vector<4x288xbf16>
    %c0_23 = arith.constant 0 : index
    %c0_24 = arith.constant 0 : index
    %50 = vector.load %arg11[%c0_23, %c0_24] : memref<36x288xbf16, #tpu.memory_space<vmem>>, vector<4x288xbf16>
    tpu.vector_store %arg11[%c0_23, %c0_24], %49 {strides = array<i32>} : memref<36x288xbf16, #tpu.memory_space<vmem>>, vector<4x288xbf16>,
    %c0_25 = arith.constant 0 : index
    %c0_26 = arith.constant 0 : index
    %c1 = arith.constant 1 : index
    %51 = vector.load %arg8[%c0_25, %c0_26, %c1] : memref<1x4x342xbf16, #tpu.memory_space<vmem>>, vector<1x4x288xbf16>
    %52 = vector.shape_cast %51 : vector<1x4x288xbf16> to vector<4x288xbf16>
    %c4 = arith.constant 4 : index
    %c0_27 = arith.constant 0 : index
    %53 = vector.load %arg11[%c4, %c0_27] : memref<36x288xbf16, #tpu.memory_space<vmem>>, vector<4x288xbf16>
    tpu.vector_store %arg11[%c4, %c0_27], %52 {strides = array<i32>} : memref<36x288xbf16, #tpu.memory_space<vmem>>, vector<4x288xbf16>,
    %c0_28 = arith.constant 0 : index
    %c0_29 = arith.constant 0 : index
    %c2 = arith.constant 2 : index
    %54 = vector.load %arg8[%c0_28, %c0_29, %c2] : memref<1x4x342xbf16, #tpu.memory_space<vmem>>, vector<1x4x288xbf16>
    %55 = vector.shape_cast %54 : vector<1x4x288xbf16> to vector<4x288xbf16>
    %c8 = arith.constant 8 : index
    %c0_30 = arith.constant 0 : index
    %56 = vector.load %arg11[%c8, %c0_30] : memref<36x288xbf16, #tpu.memory_space<vmem>>, vector<4x288xbf16>
    tpu.vector_store %arg11[%c8, %c0_30], %55 {strides = array<i32>} : memref<36x288xbf16, #tpu.memory_space<vmem>>, vector<4x288xbf16>,
    %c0_31 = arith.constant 0 : index
    %c0_32 = arith.constant 0 : index
    %c18 = arith.constant 18 : index
    %57 = vector.load %arg8[%c0_31, %c0_32, %c18] : memref<1x4x342xbf16, #tpu.memory_space<vmem>>, vector<1x4x288xbf16>
    %58 = vector.shape_cast %57 : vector<1x4x288xbf16> to vector<4x288xbf16>
    %c12 = arith.constant 12 : index
    %c0_33 = arith.constant 0 : index
    %59 = vector.load %arg11[%c12, %c0_33] : memref<36x288xbf16, #tpu.memory_space<vmem>>, vector<4x288xbf16>
    tpu.vector_store %arg11[%c12, %c0_33], %58 {strides = array<i32>} : memref<36x288xbf16, #tpu.memory_space<vmem>>, vector<4x288xbf16>,
    %c0_34 = arith.constant 0 : index
    %c0_35 = arith.constant 0 : index
    %c19 = arith.constant 19 : index
    %60 = vector.load %arg8[%c0_34, %c0_35, %c19] : memref<1x4x342xbf16, #tpu.memory_space<vmem>>, vector<1x4x288xbf16>
    %61 = vector.shape_cast %60 : vector<1x4x288xbf16> to vector<4x288xbf16>
    %c16 = arith.constant 16 : index
    %c0_36 = arith.constant 0 : index
    %62 = vector.load %arg11[%c16, %c0_36] : memref<36x288xbf16, #tpu.memory_space<vmem>>, vector<4x288xbf16>
    tpu.vector_store %arg11[%c16, %c0_36], %61 {strides = array<i32>} : memref<36x288xbf16, #tpu.memory_space<vmem>>, vector<4x288xbf16>,
    %c0_37 = arith.constant 0 : index
    %c0_38 = arith.constant 0 : index
    %c20 = arith.constant 20 : index
    %63 = vector.load %arg8[%c0_37, %c0_38, %c20] : memref<1x4x342xbf16, #tpu.memory_space<vmem>>, vector<1x4x288xbf16>
    %64 = vector.shape_cast %63 : vector<1x4x288xbf16> to vector<4x288xbf16>
    %c20_39 = arith.constant 20 : index
    %c0_40 = arith.constant 0 : index
    %65 = vector.load %arg11[%c20_39, %c0_40] : memref<36x288xbf16, #tpu.memory_space<vmem>>, vector<4x288xbf16>
    tpu.vector_store %arg11[%c20_39, %c0_40], %64 {strides = array<i32>} : memref<36x288xbf16, #tpu.memory_space<vmem>>, vector<4x288xbf16>,
    %c0_41 = arith.constant 0 : index
    %c0_42 = arith.constant 0 : index
    %c36 = arith.constant 36 : index
    %66 = vector.load %arg8[%c0_41, %c0_42, %c36] : memref<1x4x342xbf16, #tpu.memory_space<vmem>>, vector<1x4x288xbf16>
    %67 = vector.shape_cast %66 : vector<1x4x288xbf16> to vector<4x288xbf16>
    %c24 = arith.constant 24 : index
    %c0_43 = arith.constant 0 : index
    %68 = vector.load %arg11[%c24, %c0_43] : memref<36x288xbf16, #tpu.memory_space<vmem>>, vector<4x288xbf16>
    tpu.vector_store %arg11[%c24, %c0_43], %67 {strides = array<i32>} : memref<36x288xbf16, #tpu.memory_space<vmem>>, vector<4x288xbf16>,
    %c0_44 = arith.constant 0 : index
    %c0_45 = arith.constant 0 : index
    %c37 = arith.constant 37 : index
    %69 = vector.load %arg8[%c0_44, %c0_45, %c37] : memref<1x4x342xbf16, #tpu.memory_space<vmem>>, vector<1x4x288xbf16>
    %70 = vector.shape_cast %69 : vector<1x4x288xbf16> to vector<4x288xbf16>
    %c28 = arith.constant 28 : index
    %c0_46 = arith.constant 0 : index
    %71 = vector.load %arg11[%c28, %c0_46] : memref<36x288xbf16, #tpu.memory_space<vmem>>, vector<4x288xbf16>
    tpu.vector_store %arg11[%c28, %c0_46], %70 {strides = array<i32>} : memref<36x288xbf16, #tpu.memory_space<vmem>>, vector<4x288xbf16>,
    %c0_47 = arith.constant 0 : index
    %c0_48 = arith.constant 0 : index
    %c38 = arith.constant 38 : index
    %72 = vector.load %arg8[%c0_47, %c0_48, %c38] : memref<1x4x342xbf16, #tpu.memory_space<vmem>>, vector<1x4x288xbf16>
    %73 = vector.shape_cast %72 : vector<1x4x288xbf16> to vector<4x288xbf16>
    %c32 = arith.constant 32 : index
    %c0_49 = arith.constant 0 : index
    %74 = vector.load %arg11[%c32, %c0_49] : memref<36x288xbf16, #tpu.memory_space<vmem>>, vector<4x288xbf16>
    tpu.vector_store %arg11[%c32, %c0_49], %73 {strides = array<i32>} : memref<36x288xbf16, #tpu.memory_space<vmem>>, vector<4x288xbf16>,
    %c0_50 = arith.constant 0 : index
    %c0_51 = arith.constant 0 : index
    %75 = vector.load %arg11[%c0_50, %c0_51] : memref<36x288xbf16, #tpu.memory_space<vmem>>, vector<36x288xbf16>
    %cst_52 = arith.constant dense<0.000000e+00> : vector<8x288xf32>
    %76 = tpu.matmul %46, %75, %cst_52 {dimension_numbers = #tpu.dot_dimension_numbers<[1], [0], [0], [1], [0, 0, 1, 1], [], []>} : vector<8x36xbf16>, vector<36x288xbf16>, vector<8x288xf32> -> vector<8x288xf32>
    %77 = vector.broadcast %47 : vector<8x1xf32> to vector<8x288xf32>
    %78 = arith.addf %76, %77 : vector<8x288xf32>
    %79 = vector.extract_strided_slice %78 {offsets = [0, 0], sizes = [8, 16], strides = [1, 1]} : vector<8x288xf32> to vector<8x16xf32>
    %c0_53 = arith.constant 0 : index
    %c0_54 = arith.constant 0 : index
    %c0_55 = arith.constant 0 : index
    %80 = vector.load %arg10[%c0_53, %c0_54, %c0_55] : memref<1x8x256xf32, #tpu.memory_space<vmem>>, vector<1x8x16xf32>
    %81 = vector.shape_cast %80 : vector<1x8x16xf32> to vector<8x16xf32>
    %82 = vector.shape_cast %79 : vector<8x16xf32> to vector<1x8x16xf32>
    tpu.vector_store %arg10[%c0_53, %c0_54, %c0_55], %82 {strides = array<i32>} : memref<1x8x256xf32, #tpu.memory_space<vmem>>, vector<1x8x16xf32>,
    %83 = vector.extract_strided_slice %78 {offsets = [0, 18], sizes = [8, 16], strides = [1, 1]} : vector<8x288xf32> to vector<8x16xf32>
    %c0_56 = arith.constant 0 : index
    %c0_57 = arith.constant 0 : index
    %c16_58 = arith.constant 16 : index
    %84 = vector.load %arg10[%c0_56, %c0_57, %c16_58] : memref<1x8x256xf32, #tpu.memory_space<vmem>>, vector<1x8x16xf32>
    %85 = vector.shape_cast %84 : vector<1x8x16xf32> to vector<8x16xf32>
    %86 = vector.shape_cast %83 : vector<8x16xf32> to vector<1x8x16xf32>
    tpu.vector_store %arg10[%c0_56, %c0_57, %c16_58], %86 {strides = array<i32>} : memref<1x8x256xf32, #tpu.memory_space<vmem>>, vector<1x8x16xf32>,
    %87 = vector.extract_strided_slice %78 {offsets = [0, 36], sizes = [8, 16], strides = [1, 1]} : vector<8x288xf32> to vector<8x16xf32>
    %c0_59 = arith.constant 0 : index
    %c0_60 = arith.constant 0 : index
    %c32_61 = arith.constant 32 : index
    %88 = vector.load %arg10[%c0_59, %c0_60, %c32_61] : memref<1x8x256xf32, #tpu.memory_space<vmem>>, vector<1x8x16xf32>
    %89 = vector.shape_cast %88 : vector<1x8x16xf32> to vector<8x16xf32>
    %90 = vector.shape_cast %87 : vector<8x16xf32> to vector<1x8x16xf32>
    tpu.vector_store %arg10[%c0_59, %c0_60, %c32_61], %90 {strides = array<i32>} : memref<1x8x256xf32, #tpu.memory_space<vmem>>, vector<1x8x16xf32>,
    %91 = vector.extract_strided_slice %78 {offsets = [0, 54], sizes = [8, 16], strides = [1, 1]} : vector<8x288xf32> to vector<8x16xf32>
    %c0_62 = arith.constant 0 : index
    %c0_63 = arith.constant 0 : index
    %c48 = arith.constant 48 : index
    %92 = vector.load %arg10[%c0_62, %c0_63, %c48] : memref<1x8x256xf32, #tpu.memory_space<vmem>>, vector<1x8x16xf32>
    %93 = vector.shape_cast %92 : vector<1x8x16xf32> to vector<8x16xf32>
    %94 = vector.shape_cast %91 : vector<8x16xf32> to vector<1x8x16xf32>
    tpu.vector_store %arg10[%c0_62, %c0_63, %c48], %94 {strides = array<i32>} : memref<1x8x256xf32, #tpu.memory_space<vmem>>, vector<1x8x16xf32>,
    %95 = vector.extract_strided_slice %78 {offsets = [0, 72], sizes = [8, 16], strides = [1, 1]} : vector<8x288xf32> to vector<8x16xf32>
    %c0_64 = arith.constant 0 : index
    %c0_65 = arith.constant 0 : index
    %c64 = arith.constant 64 : index
    %96 = vector.load %arg10[%c0_64, %c0_65, %c64] : memref<1x8x256xf32, #tpu.memory_space<vmem>>, vector<1x8x16xf32>
    %97 = vector.shape_cast %96 : vector<1x8x16xf32> to vector<8x16xf32>
    %98 = vector.shape_cast %95 : vector<8x16xf32> to vector<1x8x16xf32>
    tpu.vector_store %arg10[%c0_64, %c0_65, %c64], %98 {strides = array<i32>} : memref<1x8x256xf32, #tpu.memory_space<vmem>>, vector<1x8x16xf32>,
    %99 = vector.extract_strided_slice %78 {offsets = [0, 90], sizes = [8, 16], strides = [1, 1]} : vector<8x288xf32> to vector<8x16xf32>
    %c0_66 = arith.constant 0 : index
    %c0_67 = arith.constant 0 : index
    %c80 = arith.constant 80 : index
    %100 = vector.load %arg10[%c0_66, %c0_67, %c80] : memref<1x8x256xf32, #tpu.memory_space<vmem>>, vector<1x8x16xf32>
    %101 = vector.shape_cast %100 : vector<1x8x16xf32> to vector<8x16xf32>
    %102 = vector.shape_cast %99 : vector<8x16xf32> to vector<1x8x16xf32>
    tpu.vector_store %arg10[%c0_66, %c0_67, %c80], %102 {strides = array<i32>} : memref<1x8x256xf32, #tpu.memory_space<vmem>>, vector<1x8x16xf32>,
    %103 = vector.extract_strided_slice %78 {offsets = [0, 108], sizes = [8, 16], strides = [1, 1]} : vector<8x288xf32> to vector<8x16xf32>
    %c0_68 = arith.constant 0 : index
    %c0_69 = arith.constant 0 : index
    %c96 = arith.constant 96 : index
    %104 = vector.load %arg10[%c0_68, %c0_69, %c96] : memref<1x8x256xf32, #tpu.memory_space<vmem>>, vector<1x8x16xf32>
    %105 = vector.shape_cast %104 : vector<1x8x16xf32> to vector<8x16xf32>
    %106 = vector.shape_cast %103 : vector<8x16xf32> to vector<1x8x16xf32>
    tpu.vector_store %arg10[%c0_68, %c0_69, %c96], %106 {strides = array<i32>} : memref<1x8x256xf32, #tpu.memory_space<vmem>>, vector<1x8x16xf32>,
    %107 = vector.extract_strided_slice %78 {offsets = [0, 126], sizes = [8, 16], strides = [1, 1]} : vector<8x288xf32> to vector<8x16xf32>
    %c0_70 = arith.constant 0 : index
    %c0_71 = arith.constant 0 : index
    %c112 = arith.constant 112 : index
    %108 = vector.load %arg10[%c0_70, %c0_71, %c112] : memref<1x8x256xf32, #tpu.memory_space<vmem>>, vector<1x8x16xf32>
    %109 = vector.shape_cast %108 : vector<1x8x16xf32> to vector<8x16xf32>
    %110 = vector.shape_cast %107 : vector<8x16xf32> to vector<1x8x16xf32>
    tpu.vector_store %arg10[%c0_70, %c0_71, %c112], %110 {strides = array<i32>} : memref<1x8x256xf32, #tpu.memory_space<vmem>>, vector<1x8x16xf32>,
    %111 = vector.extract_strided_slice %78 {offsets = [0, 144], sizes = [8, 16], strides = [1, 1]} : vector<8x288xf32> to vector<8x16xf32>
    %c0_72 = arith.constant 0 : index
    %c0_73 = arith.constant 0 : index
    %c128 = arith.constant 128 : index
    %112 = vector.load %arg10[%c0_72, %c0_73, %c128] : memref<1x8x256xf32, #tpu.memory_space<vmem>>, vector<1x8x16xf32>
    %113 = vector.shape_cast %112 : vector<1x8x16xf32> to vector<8x16xf32>
    %114 = vector.shape_cast %111 : vector<8x16xf32> to vector<1x8x16xf32>
    tpu.vector_store %arg10[%c0_72, %c0_73, %c128], %114 {strides = array<i32>} : memref<1x8x256xf32, #tpu.memory_space<vmem>>, vector<1x8x16xf32>,
    %115 = vector.extract_strided_slice %78 {offsets = [0, 162], sizes = [8, 16], strides = [1, 1]} : vector<8x288xf32> to vector<8x16xf32>
    %c0_74 = arith.constant 0 : index
    %c0_75 = arith.constant 0 : index
    %c144 = arith.constant 144 : index
    %116 = vector.load %arg10[%c0_74, %c0_75, %c144] : memref<1x8x256xf32, #tpu.memory_space<vmem>>, vector<1x8x16xf32>
    %117 = vector.shape_cast %116 : vector<1x8x16xf32> to vector<8x16xf32>
    %118 = vector.shape_cast %115 : vector<8x16xf32> to vector<1x8x16xf32>
    tpu.vector_store %arg10[%c0_74, %c0_75, %c144], %118 {strides = array<i32>} : memref<1x8x256xf32, #tpu.memory_space<vmem>>, vector<1x8x16xf32>,
    %119 = vector.extract_strided_slice %78 {offsets = [0, 180], sizes = [8, 16], strides = [1, 1]} : vector<8x288xf32> to vector<8x16xf32>
    %c0_76 = arith.constant 0 : index
    %c0_77 = arith.constant 0 : index
    %c160 = arith.constant 160 : index
    %120 = vector.load %arg10[%c0_76, %c0_77, %c160] : memref<1x8x256xf32, #tpu.memory_space<vmem>>, vector<1x8x16xf32>
    %121 = vector.shape_cast %120 : vector<1x8x16xf32> to vector<8x16xf32>
    %122 = vector.shape_cast %119 : vector<8x16xf32> to vector<1x8x16xf32>
    tpu.vector_store %arg10[%c0_76, %c0_77, %c160], %122 {strides = array<i32>} : memref<1x8x256xf32, #tpu.memory_space<vmem>>, vector<1x8x16xf32>,
    %123 = vector.extract_strided_slice %78 {offsets = [0, 198], sizes = [8, 16], strides = [1, 1]} : vector<8x288xf32> to vector<8x16xf32>
    %c0_78 = arith.constant 0 : index
    %c0_79 = arith.constant 0 : index
    %c176 = arith.constant 176 : index
    %124 = vector.load %arg10[%c0_78, %c0_79, %c176] : memref<1x8x256xf32, #tpu.memory_space<vmem>>, vector<1x8x16xf32>
    %125 = vector.shape_cast %124 : vector<1x8x16xf32> to vector<8x16xf32>
    %126 = vector.shape_cast %123 : vector<8x16xf32> to vector<1x8x16xf32>
    tpu.vector_store %arg10[%c0_78, %c0_79, %c176], %126 {strides = array<i32>} : memref<1x8x256xf32, #tpu.memory_space<vmem>>, vector<1x8x16xf32>,
    %127 = vector.extract_strided_slice %78 {offsets = [0, 216], sizes = [8, 16], strides = [1, 1]} : vector<8x288xf32> to vector<8x16xf32>
    %c0_80 = arith.constant 0 : index
    %c0_81 = arith.constant 0 : index
    %c192 = arith.constant 192 : index
    %128 = vector.load %arg10[%c0_80, %c0_81, %c192] : memref<1x8x256xf32, #tpu.memory_space<vmem>>, vector<1x8x16xf32>
    %129 = vector.shape_cast %128 : vector<1x8x16xf32> to vector<8x16xf32>
    %130 = vector.shape_cast %127 : vector<8x16xf32> to vector<1x8x16xf32>
    tpu.vector_store %arg10[%c0_80, %c0_81, %c192], %130 {strides = array<i32>} : memref<1x8x256xf32, #tpu.memory_space<vmem>>, vector<1x8x16xf32>,
    %131 = vector.extract_strided_slice %78 {offsets = [0, 234], sizes = [8, 16], strides = [1, 1]} : vector<8x288xf32> to vector<8x16xf32>
    %c0_82 = arith.constant 0 : index
    %c0_83 = arith.constant 0 : index
    %c208 = arith.constant 208 : index
    %132 = vector.load %arg10[%c0_82, %c0_83, %c208] : memref<1x8x256xf32, #tpu.memory_space<vmem>>, vector<1x8x16xf32>
    %133 = vector.shape_cast %132 : vector<1x8x16xf32> to vector<8x16xf32>
    %134 = vector.shape_cast %131 : vector<8x16xf32> to vector<1x8x16xf32>
    tpu.vector_store %arg10[%c0_82, %c0_83, %c208], %134 {strides = array<i32>} : memref<1x8x256xf32, #tpu.memory_space<vmem>>, vector<1x8x16xf32>,
    %135 = vector.extract_strided_slice %78 {offsets = [0, 252], sizes = [8, 16], strides = [1, 1]} : vector<8x288xf32> to vector<8x16xf32>
    %c0_84 = arith.constant 0 : index
    %c0_85 = arith.constant 0 : index
    %c224 = arith.constant 224 : index
    %136 = vector.load %arg10[%c0_84, %c0_85, %c224] : memref<1x8x256xf32, #tpu.memory_space<vmem>>, vector<1x8x16xf32>
    %137 = vector.shape_cast %136 : vector<1x8x16xf32> to vector<8x16xf32>
    %138 = vector.shape_cast %135 : vector<8x16xf32> to vector<1x8x16xf32>
    tpu.vector_store %arg10[%c0_84, %c0_85, %c224], %138 {strides = array<i32>} : memref<1x8x256xf32, #tpu.memory_space<vmem>>, vector<1x8x16xf32>,
    %139 = vector.extract_strided_slice %78 {offsets = [0, 270], sizes = [8, 16], strides = [1, 1]} : vector<8x288xf32> to vector<8x16xf32>
    %c0_86 = arith.constant 0 : index
    %c0_87 = arith.constant 0 : index
    %c240 = arith.constant 240 : index
    %140 = vector.load %arg10[%c0_86, %c0_87, %c240] : memref<1x8x256xf32, #tpu.memory_space<vmem>>, vector<1x8x16xf32>
    %141 = vector.shape_cast %140 : vector<1x8x16xf32> to vector<8x16xf32>
    %142 = vector.shape_cast %139 : vector<8x16xf32> to vector<1x8x16xf32>
    tpu.vector_store %arg10[%c0_86, %c0_87, %c240], %142 {strides = array<i32>} : memref<1x8x256xf32, #tpu.memory_space<vmem>>, vector<1x8x16xf32>,
    return
  }
  func.func @transform_0(%arg0: i32) -> (i32, i32) {
    %c0_i32 = arith.constant 0 : i32
    %c0_i32_0 = arith.constant 0 : i32
    %c0_i32_1 = arith.constant 0 : i32
    return %c0_i32, %c0_i32_0 : i32, i32
  }
  func.func @transform_1(%arg0: i32) -> (i32, i32) {
    %c0_i32 = arith.constant 0 : i32
    %c0_i32_0 = arith.constant 0 : i32
    %c0_i32_1 = arith.constant 0 : i32
    return %c0_i32, %c0_i32_0 : i32, i32
  }
  func.func @transform_2(%arg0: i32) -> (i32, i32) {
    %c0_i32 = arith.constant 0 : i32
    %c0_i32_0 = arith.constant 0 : i32
    %c0_i32_1 = arith.constant 0 : i32
    return %c0_i32, %c0_i32_0 : i32, i32
  }
  func.func @transform_3(%arg0: i32) -> (i32, i32) {
    %c0_i32 = arith.constant 0 : i32
    %c0_i32_0 = arith.constant 0 : i32
    %c0_i32_1 = arith.constant 0 : i32
    return %c0_i32, %c0_i32_0 : i32, i32
  }
  func.func @transform_4(%arg0: i32) -> (i32, i32) {
    %c0_i32 = arith.constant 0 : i32
    %c0_i32_0 = arith.constant 0 : i32
    %c0_i32_1 = arith.constant 0 : i32
    return %c0_i32, %c0_i32_0 : i32, i32
  }
  func.func @transform_5(%arg0: i32) -> (i32, i32) {
    %c0_i32 = arith.constant 0 : i32
    %c0_i32_0 = arith.constant 0 : i32
    %c0_i32_1 = arith.constant 0 : i32
    return %c0_i32, %c0_i32_0 : i32, i32
  }
  func.func @transform_6(%arg0: i32) -> (i32, i32) {
    %c0_i32 = arith.constant 0 : i32
    %c0_i32_0 = arith.constant 0 : i32
    %c0_i32_1 = arith.constant 0 : i32
    return %c0_i32, %c0_i32_0 : i32, i32
  }
  func.func @transform_7(%arg0: i32) -> (i32, i32, i32) {
    %c0_i32 = arith.constant 0 : i32
    %c0_i32_0 = arith.constant 0 : i32
    %c0_i32_1 = arith.constant 0 : i32
    return %arg0, %c0_i32, %c0_i32_0 : i32, i32, i32
  }
  func.func @transform_8(%arg0: i32) -> (i32, i32) {
    %c0_i32 = arith.constant 0 : i32
    %c0_i32_0 = arith.constant 0 : i32
    %c0_i32_1 = arith.constant 0 : i32
    return %c0_i32, %c0_i32_0 : i32, i32
  }
  func.func @transform_9(%arg0: i32) -> (i32, i32, i32) {
    %c0_i32 = arith.constant 0 : i32
    %c0_i32_0 = arith.constant 0 : i32
    %c0_i32_1 = arith.constant 0 : i32
    return %arg0, %c0_i32, %c0_i32_0 : i32, i32, i32
  }
}

</mosaic_0001>

<llo_original>
// kernel: tpu_custom_call.1
$region0: #{tpu_custom_call.1}
  #allocation0 [shape = 'u32[]', space=smem, size = 0x4, offset = 0x4, fixed_abs, tag = 'smem constant byte address 0x4 - core index']
  #allocation1 [shape = 'u32[144,128]{1,0:T(1,128)}', space=vmem, size = 0x12000, scoped, tag = 'internal scratch']
  #allocation2 [shape = 'bf16[36,288]{1,0:T(8,128)(2,1)}', space=vmem, size = 0x7800, scoped, tag = 'scratch operand']
  %s0 = inlined_call_operand.vmem [shape: f32[8,36], index: 0, kind: input, shape index: {}]
  %s1 = inlined_call_operand.hbm [shape: f32[8,36], index: 1, kind: input, shape index: {}]
  %s2 = inlined_call_operand.hbm [shape: f32[8,36], index: 2, kind: input, shape index: {}]
  %s3 = inlined_call_operand.hbm [shape: f32[8,36], index: 3, kind: input, shape index: {}]
  %s4 = inlined_call_operand.hbm [shape: f32[8,36], index: 4, kind: input, shape index: {}]
  %s5 = inlined_call_operand.vmem [shape: f32[1,36], index: 5, kind: input, shape index: {}]
  %s6 = inlined_call_operand.hbm [shape: f32[1,36], index: 6, kind: input, shape index: {}]
  %s7 = inlined_call_operand.vmem [shape: bf16[2,4,342], index: 7, kind: input, shape index: {}]
  %s8 = inlined_call_operand.vmem [shape: f32[8,1], index: 8, kind: input, shape index: {}]
  %s9 = inlined_call_operand.hbm [shape: f32[2,8,256], index: 9, kind: output, shape index: {}]
  %s10 = sld [smem:[#allocation0]]
  $region89: #{tpu_custom_call.1} parent=0
    _
  %s12 = ssub.s32 1, %s10
  %s13 = scalar_select 0, %s12, %s10
  $region1: #{tpu_custom_call.1} parent=0
    #allocation3 [shape = 'u8[4096]{0}', space=vmem, size = 0x1000, scoped, tag = 'input window, operand 1, single buffered']
    #allocation4 [shape = 's32[2]{0}', space=sflag, size = 0x8, scoped, tag = 'scoped memory for tpu_custom_call.1']
    #allocation5 [shape = 's32[2]{0}', space=sflag, size = 0x8, scoped, tag = 'scoped memory for tpu_custom_call.1']
    #allocation6 [shape = 'u8[4096]{0}', space=vmem, size = 0x1000, scoped, tag = 'input window, operand 2, single buffered']
    #allocation7 [shape = 's32[1]{0}', space=sflag, size = 0x4, scoped, tag = 'scoped memory for tpu_custom_call.1']
    #allocation8 [shape = 'u8[4096]{0}', space=vmem, size = 0x1000, scoped, tag = 'input window, operand 3, single buffered']
    #allocation9 [shape = 'u8[4096]{0}', space=vmem, size = 0x1000, scoped, tag = 'input window, operand 4, single buffered']
    #allocation10 [shape = 's32[1]{0}', space=sflag, size = 0x4, scoped, tag = 'scoped memory for tpu_custom_call.1']
    #allocation11 [shape = 'u8[512]{0}', space=vmem, size = 0x400, scoped, tag = 'input window, operand 6, single buffered']
    #allocation12 [shape = 'u8[16384]{0}', space=vmem, size = 0x4000, scoped, tag = 'output window, operand 0']
    %14 = vsyncpa [#allocation4], 0
    %15 = vsyncpa [#allocation7], 0
    %16 = vsyncpa [#allocation10], 0
    %17 = vsyncpa [#allocation5], 0
    %s18 = scalar_lea.sflag [#allocation5], 1
    %19 = vsyncpa %s18, 0
    loop: start=0, step=1, limit=4
    $region2: #{tpu_custom_call.1} parent=1 // loop_pre_header
      _
    $region3: #{tpu_custom_call.1} parent=1 // loop_header
      %s21 = sphi 0, %s25
      %p22 = scmp.ge.s32.totalorder %s21, 4
      %s29 = sphi 0, %s29
      %s31 = sphi 0, %s29
      %s32 = sphi 0, %s31
      %s46 = sphi 0, %s32
      %s50 = sphi 0, %s50
      %s52 = sphi 0, %s50
      %s53 = sphi 0, %s52
      %s67 = sphi 0, %s53
      %s71 = sphi 0, %s71
      %s73 = sphi 0, %s71
      %s74 = sphi 0, %s73
      %s88 = sphi 0, %s74
      %s92 = sphi 0, %s92
      %s94 = sphi 0, %s92
      %s95 = sphi 0, %s94
      %s109 = sphi 0, %s95
      %s113 = sphi 0, %s113
      %s115 = sphi 0, %s113
      %s116 = sphi 0, %s115
      %s130 = sphi 0, %s116
      %s134 = sphi 0, %s134
      %s136 = sphi 0, %s134
      %s137 = sphi 0, %s136
      %s151 = sphi 0, %s137
      %s155 = sphi 0, %s155
      %s157 = sphi 0, %s155
      %s158 = sphi 0, %s157
      %s172 = sphi 0, %s158
      %s178 = sphi 0, %s180
      %s181 = sphi 0, %s178
      %s182 = sphi 0, %s181
      %s198 = sphi 0, %s182
      %s202 = sphi 0, %s202
      %s204 = sphi 0, %s202
      %s205 = sphi 0, %s204
      %s219 = sphi 0, %s205
      %s225 = sphi 0, %s227
      %s228 = sphi 0, %s225
      %s229 = sphi 0, %s228
      %s245 = sphi 0, %s229
    $region4: #{tpu_custom_call.1} parent=1 // loop_header_branch
      %24 = sbr.rel (%p22) target = $region8
    $region5: #{tpu_custom_call.1} parent=1 // loop_body
      %s26 = ssub.s32 %s21, 1
      %s27 = ssub.s32 %s21, 2
      %s28 = sadd.s32 %s21, 1
      %s30 = sadd.s32 %s29, 1
      %p33 = scmp.eq.s32.totalorder %s21, 1
      %p34 = scmp.ne.s32.totalorder %s29, %s31
      %p35 = scmp.eq.s32.totalorder %s21, 0
      %p36 = por %p34, %p35
      %p37 = scmp.ne.s32.totalorder %s29, %s31
      %p38 = scmp.eq.s32.totalorder %s26, 1
      %p39 = por %p37, %p38
      %p40 = scmp.ne.s32.totalorder %s31, %s32
      %p41 = scmp.eq.s32.totalorder %s26, 0
      %p42 = por %p40, %p41
      %p43 = scmp.ne.s32.totalorder %s31, %s32
      %p44 = scmp.eq.s32.totalorder %s27, 1
      %p45 = por %p43, %p44
      %p47 = scmp.ne.s32.totalorder %s32, %s46
      %p48 = scmp.eq.s32.totalorder %s27, 0
      %p49 = por %p47, %p48
      %s51 = sadd.s32 %s50, 1
      %p54 = scmp.eq.s32.totalorder %s21, 1
      %p55 = scmp.ne.s32.totalorder %s50, %s52
      %p56 = scmp.eq.s32.totalorder %s21, 0
      %p57 = por %p55, %p56
      %p58 = scmp.ne.s32.totalorder %s50, %s52
      %p59 = scmp.eq.s32.totalorder %s26, 1
      %p60 = por %p58, %p59
      %p61 = scmp.ne.s32.totalorder %s52, %s53
      %p62 = scmp.eq.s32.totalorder %s26, 0
      %p63 = por %p61, %p62
      %p64 = scmp.ne.s32.totalorder %s52, %s53
      %p65 = scmp.eq.s32.totalorder %s27, 1
      %p66 = por %p64, %p65
      %p68 = scmp.ne.s32.totalorder %s53, %s67
      %p69 = scmp.eq.s32.totalorder %s27, 0
      %p70 = por %p68, %p69
      %s72 = sadd.s32 %s71, 1
      %p75 = scmp.eq.s32.totalorder %s21, 1
      %p76 = scmp.ne.s32.totalorder %s71, %s73
      %p77 = scmp.eq.s32.totalorder %s21, 0
      %p78 = por %p76, %p77
      %p79 = scmp.ne.s32.totalorder %s71, %s73
      %p80 = scmp.eq.s32.totalorder %s26, 1
      %p81 = por %p79, %p80
      %p82 = scmp.ne.s32.totalorder %s73, %s74
      %p83 = scmp.eq.s32.totalorder %s26, 0
      %p84 = por %p82, %p83
      %p85 = scmp.ne.s32.totalorder %s73, %s74
      %p86 = scmp.eq.s32.totalorder %s27, 1
      %p87 = por %p85, %p86
      %p89 = scmp.ne.s32.totalorder %s74, %s88
      %p90 = scmp.eq.s32.totalorder %s27, 0
      %p91 = por %p89, %p90
      %s93 = sadd.s32 %s92, 1
      %p96 = scmp.eq.s32.totalorder %s21, 1
      %p97 = scmp.ne.s32.totalorder %s92, %s94
      %p98 = scmp.eq.s32.totalorder %s21, 0
      %p99 = por %p97, %p98
      %p100 = scmp.ne.s32.totalorder %s92, %s94
      %p101 = scmp.eq.s32.totalorder %s26, 1
      %p102 = por %p100, %p101
      %p103 = scmp.ne.s32.totalorder %s94, %s95
      %p104 = scmp.eq.s32.totalorder %s26, 0
      %p105 = por %p103, %p104
      %p106 = scmp.ne.s32.totalorder %s94, %s95
      %p107 = scmp.eq.s32.totalorder %s27, 1
      %p108 = por %p106, %p107
      %p110 = scmp.ne.s32.totalorder %s95, %s109
      %p111 = scmp.eq.s32.totalorder %s27, 0
      %p112 = por %p110, %p111
      %s114 = sadd.s32 %s113, 1
      %p117 = scmp.eq.s32.totalorder %s21, 1
      %p118 = scmp.ne.s32.totalorder %s113, %s115
      %p119 = scmp.eq.s32.totalorder %s21, 0
      %p120 = por %p118, %p119
      %p121 = scmp.ne.s32.totalorder %s113, %s115
      %p122 = scmp.eq.s32.totalorder %s26, 1
      %p123 = por %p121, %p122
      %p124 = scmp.ne.s32.totalorder %s115, %s116
      %p125 = scmp.eq.s32.totalorder %s26, 0
      %p126 = por %p124, %p125
      %p127 = scmp.ne.s32.totalorder %s115, %s116
      %p128 = scmp.eq.s32.totalorder %s27, 1
      %p129 = por %p127, %p128
      %p131 = scmp.ne.s32.totalorder %s116, %s130
      %p132 = scmp.eq.s32.totalorder %s27, 0
      %p133 = por %p131, %p132
      %s135 = sadd.s32 %s134, 1
      %p138 = scmp.eq.s32.totalorder %s21, 1
      %p139 = scmp.ne.s32.totalorder %s134, %s136
      %p140 = scmp.eq.s32.totalorder %s21, 0
      %p141 = por %p139, %p140
      %p142 = scmp.ne.s32.totalorder %s134, %s136
      %p143 = scmp.eq.s32.totalorder %s26, 1
      %p144 = por %p142, %p143
      %p145 = scmp.ne.s32.totalorder %s136, %s137
      %p146 = scmp.eq.s32.totalorder %s26, 0
      %p147 = por %p145, %p146
      %p148 = scmp.ne.s32.totalorder %s136, %s137
      %p149 = scmp.eq.s32.totalorder %s27, 1
      %p150 = por %p148, %p149
      %p152 = scmp.ne.s32.totalorder %s137, %s151
      %p153 = scmp.eq.s32.totalorder %s27, 0
      %p154 = por %p152, %p153
      %s156 = sadd.s32 %s155, 1
      %p159 = scmp.eq.s32.totalorder %s21, 1
      %p160 = scmp.ne.s32.totalorder %s155, %s157
      %p161 = scmp.eq.s32.totalorder %s21, 0
      %p162 = por %p160, %p161
      %p163 = scmp.ne.s32.totalorder %s155, %s157
      %p164 = scmp.eq.s32.totalorder %s26, 1
      %p165 = por %p163, %p164
      %p166 = scmp.ne.s32.totalorder %s157, %s158
      %p167 = scmp.eq.s32.totalorder %s26, 0
      %p168 = por %p166, %p167
      %p169 = scmp.ne.s32.totalorder %s157, %s158
      %p170 = scmp.eq.s32.totalorder %s27, 1
      %p171 = por %p169, %p170
      %p173 = scmp.ne.s32.totalorder %s158, %s172
      %p174 = scmp.eq.s32.totalorder %s27, 0
      %p175 = por %p173, %p174
      %s176 = ssub.s32 %s21, %s28
      %p177 = scmp.eq.s32.totalorder %s176, 0
      %s179 = sadd.s32 %s178, 1
      %s180 = scalar_select %p177, %s178, %s179
      %p183 = pneg %p177
      %p184 = scmp.eq.s32.totalorder %s21, 1
      %p185 = por %p183, %p184
      %p186 = scmp.ne.s32.totalorder %s178, %s181
      %p187 = scmp.eq.s32.totalorder %s21, 0
      %p188 = por %p186, %p187
      %p189 = scmp.ne.s32.totalorder %s178, %s181
      %p190 = scmp.eq.s32.totalorder %s26, 1
      %p191 = por %p189, %p190
      %p192 = scmp.ne.s32.totalorder %s181, %s182
      %p193 = scmp.eq.s32.totalorder %s26, 0
      %p194 = por %p192, %p193
      %p195 = scmp.ne.s32.totalorder %s181, %s182
      %p196 = scmp.eq.s32.totalorder %s27, 1
      %p197 = por %p195, %p196
      %p199 = scmp.ne.s32.totalorder %s182, %s198
      %p200 = scmp.eq.s32.totalorder %s27, 0
      %p201 = por %p199, %p200
      %s203 = sadd.s32 %s202, 1
      %p206 = scmp.eq.s32.totalorder %s21, 1
      %p207 = scmp.ne.s32.totalorder %s202, %s204
      %p208 = scmp.eq.s32.totalorder %s21, 0
      %p209 = por %p207, %p208
      %p210 = scmp.ne.s32.totalorder %s202, %s204
      %p211 = scmp.eq.s32.totalorder %s26, 1
      %p212 = por %p210, %p211
      %p213 = scmp.ne.s32.totalorder %s204, %s205
      %p214 = scmp.eq.s32.totalorder %s26, 0
      %p215 = por %p213, %p214
      %p216 = scmp.ne.s32.totalorder %s204, %s205
      %p217 = scmp.eq.s32.totalorder %s27, 1
      %p218 = por %p216, %p217
      %p220 = scmp.ne.s32.totalorder %s205, %s219
      %p221 = scmp.eq.s32.totalorder %s27, 0
      %p222 = por %p220, %p221
      %s223 = ssub.s32 %s21, %s28
      %p224 = scmp.eq.s32.totalorder %s223, 0
      %s226 = sadd.s32 %s225, 1
      %s227 = scalar_select %p224, %s225, %s226
      %p230 = pneg %p224
      %p231 = scmp.eq.s32.totalorder %s21, 1
      %p232 = por %p230, %p231
      %p233 = scmp.ne.s32.totalorder %s225, %s228
      %p234 = scmp.eq.s32.totalorder %s21, 0
      %p235 = por %p233, %p234
      %p236 = scmp.ne.s32.totalorder %s225, %s228
      %p237 = scmp.eq.s32.totalorder %s26, 1
      %p238 = por %p236, %p237
      %p239 = scmp.ne.s32.totalorder %s228, %s229
      %p240 = scmp.eq.s32.totalorder %s26, 0
      %p241 = por %p239, %p240
      %p242 = scmp.ne.s32.totalorder %s228, %s229
      %p243 = scmp.eq.s32.totalorder %s27, 1
      %p244 = por %p242, %p243
      %p246 = scmp.ne.s32.totalorder %s229, %s245
      %p247 = scmp.eq.s32.totalorder %s27, 0
      %p248 = por %p246, %p247
      %p249 = scmp.le.s32.totalorder 1, %s21
      %p250 = scmp.lt.s32.totalorder %s21, 3
      %p251 = pnand %p249, %p250
      %p252 = pneg %p251
      // Predicated region
      $region9: #{tpu_custom_call.1} parent=5 // pred_check
        _
      $region10: #{tpu_custom_call.1} parent=5 // pred_check_branch
        %254 = sbr.rel (%p251) target = $region12
      $region11: #{tpu_custom_call.1} parent=5 // pred_region
        %s255 = ssub.s32 %s21, 1
        // Predicated region
        $region13: #{tpu_custom_call.1} parent=11 // pred_check
          %p256 = pneg %p42
        $region14: #{tpu_custom_call.1} parent=11 // pred_check_branch
          %258 = sbr.rel (%p256) target = $region16
        $region15: #{tpu_custom_call.1} parent=11 // pred_region
          _
        $region16: #{tpu_custom_call.1} parent=11 // pred_fallthru
          _
        // Predicated region
        $region17: #{tpu_custom_call.1} parent=11 // pred_check
          %p259 = pneg %p63
        $region18: #{tpu_custom_call.1} parent=11 // pred_check_branch
          %261 = sbr.rel (%p259) target = $region20
        $region19: #{tpu_custom_call.1} parent=11 // pred_region
          %s263 = ssub.s32 128, 128
          %264 = vsyncadd [#allocation4], %s263
          %s266 = sshll.u32 [#allocation3], 4
          %s267 = int_to_ptr.vmem [resolvable:$true] %s266
          %269 = dma.hbm_to_vmem [thread:$0]  %s1, 128, %s267, [#allocation4]
        $region20: #{tpu_custom_call.1} parent=11 // pred_fallthru
          _
        // Predicated region
        $region21: #{tpu_custom_call.1} parent=11 // pred_check
          %p270 = pneg %p84
        $region22: #{tpu_custom_call.1} parent=11 // pred_check_branch
          %272 = sbr.rel (%p270) target = $region24
        $region23: #{tpu_custom_call.1} parent=11 // pred_region
          %s274 = ssub.s32 128, 128
          %275 = vsyncadd [#allocation7], %s274
          %s277 = sshll.u32 [#allocation6], 4
          %s278 = int_to_ptr.vmem [resolvable:$true] %s277
          %280 = dma.hbm_to_vmem [thread:$0]  %s2, 128, %s278, [#allocation7]
        $region24: #{tpu_custom_call.1} parent=11 // pred_fallthru
          _
        // Predicated region
        $region25: #{tpu_custom_call.1} parent=11 // pred_check
          %p281 = pneg %p105
        $region26: #{tpu_custom_call.1} parent=11 // pred_check_branch
          %283 = sbr.rel (%p281) target = $region28
        $region27: #{tpu_custom_call.1} parent=11 // pred_region
          %s285 = ssub.s32 128, 128
          %286 = vsyncadd [#allocation7], %s285
          %s288 = sshll.u32 [#allocation8], 4
          %s289 = int_to_ptr.vmem [resolvable:$true] %s288
          %291 = dma.hbm_to_vmem [thread:$0]  %s3, 128, %s289, [#allocation7]
        $region28: #{tpu_custom_call.1} parent=11 // pred_fallthru
          _
        // Predicated region
        $region29: #{tpu_custom_call.1} parent=11 // pred_check
          %p292 = pneg %p126
        $region30: #{tpu_custom_call.1} parent=11 // pred_check_branch
          %294 = sbr.rel (%p292) target = $region32
        $region31: #{tpu_custom_call.1} parent=11 // pred_region
          %s296 = ssub.s32 128, 128
          %297 = vsyncadd [#allocation10], %s296
          %s299 = sshll.u32 [#allocation9], 4
          %s300 = int_to_ptr.vmem [resolvable:$true] %s299
          %302 = dma.hbm_to_vmem [thread:$0]  %s4, 128, %s300, [#allocation10]
        $region32: #{tpu_custom_call.1} parent=11 // pred_fallthru
          _
        // Predicated region
        $region33: #{tpu_custom_call.1} parent=11 // pred_check
          %p303 = pneg %p147
        $region34: #{tpu_custom_call.1} parent=11 // pred_check_branch
          %305 = sbr.rel (%p303) target = $region36
        $region35: #{tpu_custom_call.1} parent=11 // pred_region
          _
        $region36: #{tpu_custom_call.1} parent=11 // pred_fallthru
          _
        // Predicated region
        $region37: #{tpu_custom_call.1} parent=11 // pred_check
          %p306 = pneg %p168
        $region38: #{tpu_custom_call.1} parent=11 // pred_check_branch
          %308 = sbr.rel (%p306) target = $region40
        $region39: #{tpu_custom_call.1} parent=11 // pred_region
          %s310 = ssub.s32 16, 16
          %311 = vsyncadd [#allocation10], %s310
          %s313 = sshll.u32 [#allocation11], 4
          %s314 = int_to_ptr.vmem [resolvable:$true] %s313
          %316 = dma.hbm_to_vmem [thread:$0]  %s6, 16, %s314, [#allocation10]
        $region40: #{tpu_custom_call.1} parent=11 // pred_fallthru
          _
        // Predicated region
        $region41: #{tpu_custom_call.1} parent=11 // pred_check
          %p317 = pneg %p215
        $region42: #{tpu_custom_call.1} parent=11 // pred_check_branch
          %319 = sbr.rel (%p317) target = $region44
        $region43: #{tpu_custom_call.1} parent=11 // pred_region
          _
        $region44: #{tpu_custom_call.1} parent=11 // pred_fallthru
          _
      $region12: #{tpu_custom_call.1} parent=5 // pred_fallthru
        _
      %p320 = scmp.lt.s32.totalorder %s21, 2
      // Predicated region
      $region45: #{tpu_custom_call.1} parent=5 // pred_check
        %p321 = pneg %p320
      $region46: #{tpu_custom_call.1} parent=5 // pred_check_branch
        %323 = sbr.rel (%p321) target = $region48
      $region47: #{tpu_custom_call.1} parent=5 // pred_region
        // Predicated region
        $region49: #{tpu_custom_call.1} parent=47 // pred_check
          %p324 = pneg %p188
        $region50: #{tpu_custom_call.1} parent=47 // pred_check_branch
          %326 = sbr.rel (%p324) target = $region52
        $region51: #{tpu_custom_call.1} parent=47 // pred_region
          %p327 = scmp.lt.s32.totalorder %s21, 1
          %s328 = scalar_select %p327, %s21, 1
          %s329 = smul.addr %s328, 3
          %s330 = smul.addr %s329, 2
          %s331 = scalar_lea.vmem %s7, %s330
        $region52: #{tpu_custom_call.1} parent=47 // pred_fallthru
          _
      $region48: #{tpu_custom_call.1} parent=5 // pred_fallthru
        _
      %p332 = scmp.le.s32.totalorder 1, %s21
      %p333 = scmp.lt.s32.totalorder %s21, 3
      %p334 = pnand %p332, %p333
      %p335 = pneg %p334
      // Predicated region
      $region53: #{tpu_custom_call.1} parent=5 // pred_check
        _
      $region54: #{tpu_custom_call.1} parent=5 // pred_check_branch
        %337 = sbr.rel (%p334) target = $region56
      $region55: #{tpu_custom_call.1} parent=5 // pred_region
        %s338 = ssub.s32 %s21, 1
        // Predicated region
        $region57: #{tpu_custom_call.1} parent=55 // pred_check
          %p339 = pneg %p63
        $region58: #{tpu_custom_call.1} parent=55 // pred_check_branch
          %341 = sbr.rel (%p339) target = $region60
        $region59: #{tpu_custom_call.1} parent=55 // pred_region
          %342 = dma.done [#allocation4], 128
        $region60: #{tpu_custom_call.1} parent=55 // pred_fallthru
          _
        // Predicated region
        $region61: #{tpu_custom_call.1} parent=55 // pred_check
          %p343 = pneg %p84
        $region62: #{tpu_custom_call.1} parent=55 // pred_check_branch
          %345 = sbr.rel (%p343) target = $region64
        $region63: #{tpu_custom_call.1} parent=55 // pred_region
          %346 = dma.done [#allocation7], 128
        $region64: #{tpu_custom_call.1} parent=55 // pred_fallthru
          _
        // Predicated region
        $region65: #{tpu_custom_call.1} parent=55 // pred_check
          %p347 = pneg %p105
        $region66: #{tpu_custom_call.1} parent=55 // pred_check_branch
          %349 = sbr.rel (%p347) target = $region68
        $region67: #{tpu_custom_call.1} parent=55 // pred_region
          %350 = dma.done [#allocation7], 128
        $region68: #{tpu_custom_call.1} parent=55 // pred_fallthru
          _
        // Predicated region
        $region69: #{tpu_custom_call.1} parent=55 // pred_check
          %p351 = pneg %p126
        $region70: #{tpu_custom_call.1} parent=55 // pred_check_branch
          %353 = sbr.rel (%p351) target = $region72
        $region71: #{tpu_custom_call.1} parent=55 // pred_region
          %354 = dma.done [#allocation10], 128
        $region72: #{tpu_custom_call.1} parent=55 // pred_fallthru
          _
        // Predicated region
        $region73: #{tpu_custom_call.1} parent=55 // pred_check
          %p355 = pneg %p168
        $region74: #{tpu_custom_call.1} parent=55 // pred_check_branch
          %357 = sbr.rel (%p355) target = $region76
        $region75: #{tpu_custom_call.1} parent=55 // pred_region
          %358 = dma.done [#allocation10], 16
        $region76: #{tpu_custom_call.1} parent=55 // pred_fallthru
          _
        %p359 = pneg %p42
        %p360 = pneg %p39
        %p361 = pneg %p63
        %p362 = pneg %p60
        %p363 = pneg %p84
        %p364 = pneg %p81
        %p365 = pneg %p105
        %p366 = pneg %p102
        %p367 = pneg %p126
        %p368 = pneg %p123
        %p369 = pneg %p147
        %p370 = pneg %p144
        %p371 = pneg %p168
        %p372 = pneg %p165
        %p373 = scmp.lt.s32.totalorder %s26, 1
        %s374 = scalar_select %p373, %s26, 1
        %s375 = smul.addr %s374, 3
        %s376 = smul.addr %s375, 2
        %s377 = scalar_lea.vmem %s7, %s376
        %p378 = pneg %p194
        %p379 = pneg %p191
        %p380 = pneg %p215
        %p381 = pneg %p212
        %p382 = pneg %p241
        %p383 = pneg %p238
        %s384 = sand.u32 %s228, 1
        %s385 = scalar_lea.sflag [#allocation5], %s384
        %s386 = sand.u32 %s228, 1
        %s387 = smul.addr %s386, 16
        %s388 = scalar_lea.vmem [#allocation12], %s387
        %p389 = scmp.lt.s32.totalorder %s26, 1
        %s390 = scalar_select %p389, %s26, 1
        %s391 = smul.addr %s390, 3
        %s392 = smul.addr %s391, 2
        %s393 = scalar_lea.vmem %s7, %s392
        %v395 = vld [vmem:[%s0] sm:$0xff]
        %v396 = vld [vmem:[#allocation3] sm:$0xff]
        %v397 = vld [vmem:[#allocation6] sm:$0xff]
        %v398 = vld [vmem:[#allocation8] sm:$0xff]
        %v399 = vld [vmem:[#allocation9] sm:$0xff]
        %v400 = vld [vmem:[%s5] sm:$0x1]
        %v401 = vld [vmem:[#allocation11] sm:$0x1]
        %v402 = vrcp.pop %v398
        %v403 = vmul.f32 %v395, %v402
        %v404 = vsub.f32 %v396, 3.1415927
        %v405 = vand.u32 2147483647, %v404
        %vm406 = vcmp.le.f32.partialorder %v405, 0.7853982
        %vm407 = vcmp.lt.s32.totalorder %v404, 0
        %v408 = vand.u32 %v404, 2139095040
        %v409 = vshrl.u32 %v408, 23
        %v410 = vsub.s32 %v409, 127
        %v411 = vand.u32 2147483647, %v404
        %v412 = vand.u32 %v411, 8388607
        %v413 = vor.u32 %v412, 8388608
        %v414 = vsub.s32 0, %v413
        %v415 = vadd.s32 %v410, 1
        %vm416 = vcmp.gt.s32.totalorder %v415, 0
        %v417 = vsel %vm416, %v415, 0
        %v418 = vshrl.u32 %v417, 5
        %v419 = vand.u32 %v417, 31
        %v420 = vsub.s32 32, %v419
        %v421 = vshrl.u32 683565275, %v420
        %v422 = vshll.u32 683565275, %v419
        %v423 = vshrl.u32 2475754826, %v420
        %v424 = vor.u32 %v422, %v423
        %v425 = vshll.u32 2475754826, %v419
        %v426 = vshrl.u32 2131351028, %v420
        %v427 = vor.u32 %v425, %v426
        %v428 = vshll.u32 2131351028, %v419
        %v429 = vshrl.u32 2102212464, %v420
        %v430 = vor.u32 %v428, %v429
        %v431 = vshll.u32 2102212464, %v419
        %v432 = vshrl.u32 920167782, %v420
        %v433 = vor.u32 %v431, %v432
        %v434 = vshll.u32 920167782, %v419
        %v435 = vshrl.u32 1326507024, %v420
        %v436 = vor.u32 %v434, %v435
        %vm437 = vcmp.lt.s32.totalorder %v418, 1
        %vm438 = vcmp.lt.s32.totalorder %v418, 2
        %vm439 = vcmp.lt.s32.totalorder %v418, 3
        %vm440 = vcmp.lt.s32.totalorder %v418, 4
        %v441 = vsel %vm437, %v421, %v424
        %v442 = vsel %vm440, %v430, 2102212464
        %v443 = vsel %vm439, %v427, %v442
        %v444 = vsel %vm438, %v441, %v443
        %v445 = vsel %vm437, %v424, %v427
        %v446 = vsel %vm440, %v433, 920167782
        %v447 = vsel %vm439, %v430, %v446
        %v448 = vsel %vm438, %v445, %v447
        %v449 = vsel %vm437, %v427, %v430
        %v450 = vsel %vm440, %v436, 1326507024
        %v451 = vsel %vm439, %v433, %v450
        %v452 = vsel %vm438, %v449, %v451
        %v453 = vshll.u32 %v413, 8
        %v454 = vmul.u32.u64.compose %v453, %v452
        %v455 = vextract.low.u32 %v454
        %v456 = vextract.high.u32 %v454
        %v457 = vmul.u32.u64.compose %v453, %v448
        %v458 = vextract.low.u32 %v457
        %v459 = vextract.high.u32 %v457
        %v460 = vmul.u32 %v453, %v444
        %v461 = vadd.s32 %v456, %v458
        %vm462 = vc.u32 %v456, %v458
        %v463 = vadd.s32 %v459, 1
        %v464 = vsel %vm462, %v463, %v459
        %v465 = vadd.s32 %v460, %v464
        %v466 = vadd.s32 %v465, 536870912
        %v467 = vshrl.u32 %v466, 30
        %v468 = vshll.u32 %v467, 30
        %v469 = vsub.s32 %v465, %v468
        %vm470 = vcmp.lt.s32.totalorder %v469, 0
        %v471 = vsub.s32 0, %v469
        %v472 = vsel %vm470, %v471, %v469
        %v473 = vclz %v472
        %v474 = vsub.s32 %v473, 2
        %vm475 = vcmp.gt.s32.totalorder 0, %v474
        %v476 = vsel %vm475, 0, %v474
        %v477 = vsub.s32 32, %v476
        %v478 = vshll.u32 %v469, %v476
        %v479 = vshrl.u32 %v461, %v477
        %v480 = vor.u32 %v478, %v479
        %v481 = vsub.s32 4294967266, %v476
        %v482 = vadd.s32 %v481, 127
        %v483 = vshll.u32 %v482, 23
        %v484 = vor.u32 4788187, %v483
        %v485 = vand.u32 2147483647, %v484
        %v487 = vcvt.s32.f32 %v480
        %v488 = vmul.f32 %v487, %v485
        %v489 = vxor.u32 %v488, 2147483648
        %v490 = vsel %vm407, %v489, %v488
        %v491 = vsub.s32 4, %v467
        %v492 = vsel %vm407, %v491, %v467
        %v493 = vsel %vm406, %v404, %v490
        %v494 = vsel %vm406, 0, %v492
        %v495 = vcosq.f32.pop %v493
        %v496 = vsinq.f32.pop %v493
        %vm497 = vweird.f32 %v404
        %v498 = vand.u32 %v494, 3
        %vm499 = vcmp.lt.s32.totalorder %v498, 2
        %vm500 = vcmp.eq.s32.totalorder %v498, 0
        %v501 = vxor.u32 %v496, 2147483648
        %v502 = vsel %vm500, %v495, %v501
        %vm503 = vcmp.eq.s32.totalorder %v498, 2
        %v504 = vxor.u32 %v495, 2147483648
        %v505 = vsel %vm503, %v504, %v496
        %v506 = vsel %vm499, %v502, %v505
        %v507 = vsel %vm497, nan, %v506
        %v508 = vand.u32 2147483647, %v404
        %vm509 = vcmp.le.f32.partialorder %v508, 0.7853982
        %vm510 = vcmp.lt.s32.totalorder %v404, 0
        %v511 = vand.u32 %v404, 2139095040
        %v512 = vshrl.u32 %v511, 23
        %v513 = vsub.s32 %v512, 127
        %v514 = vand.u32 2147483647, %v404
        %v515 = vand.u32 %v514, 8388607
        %v516 = vor.u32 %v515, 8388608
        %v517 = vsub.s32 0, %v516
        %v518 = vadd.s32 %v513, 1
        %vm519 = vcmp.gt.s32.totalorder %v518, 0
        %v520 = vsel %vm519, %v518, 0
        %v521 = vshrl.u32 %v520, 5
        %v522 = vand.u32 %v520, 31
        %v523 = vsub.s32 32, %v522
        %v524 = vshrl.u32 683565275, %v523
        %v525 = vshll.u32 683565275, %v522
        %v526 = vshrl.u32 2475754826, %v523
        %v527 = vor.u32 %v525, %v526
        %v528 = vshll.u32 2475754826, %v522
        %v529 = vshrl.u32 2131351028, %v523
        %v530 = vor.u32 %v528, %v529
        %v531 = vshll.u32 2131351028, %v522
        %v532 = vshrl.u32 2102212464, %v523
        %v533 = vor.u32 %v531, %v532
        %v534 = vshll.u32 2102212464, %v522
        %v535 = vshrl.u32 920167782, %v523
        %v536 = vor.u32 %v534, %v535
        %v537 = vshll.u32 920167782, %v522
        %v538 = vshrl.u32 1326507024, %v523
        %v539 = vor.u32 %v537, %v538
        %vm540 = vcmp.lt.s32.totalorder %v521, 1
        %vm541 = vcmp.lt.s32.totalorder %v521, 2
        %vm542 = vcmp.lt.s32.totalorder %v521, 3
        %vm543 = vcmp.lt.s32.totalorder %v521, 4
        %v544 = vsel %vm540, %v524, %v527
        %v545 = vsel %vm543, %v533, 2102212464
        %v546 = vsel %vm542, %v530, %v545
        %v547 = vsel %vm541, %v544, %v546
        %v548 = vsel %vm540, %v527, %v530
        %v549 = vsel %vm543, %v536, 920167782
        %v550 = vsel %vm542, %v533, %v549
        %v551 = vsel %vm541, %v548, %v550
        %v552 = vsel %vm540, %v530, %v533
        %v553 = vsel %vm543, %v539, 1326507024
        %v554 = vsel %vm542, %v536, %v553
        %v555 = vsel %vm541, %v552, %v554
        %v556 = vshll.u32 %v516, 8
        %v557 = vmul.u32.u64.compose %v556, %v555
        %v558 = vextract.low.u32 %v557
        %v559 = vextract.high.u32 %v557
        %v560 = vmul.u32.u64.compose %v556, %v551
        %v561 = vextract.low.u32 %v560
        %v562 = vextract.high.u32 %v560
        %v563 = vmul.u32 %v556, %v547
        %v564 = vadd.s32 %v559, %v561
        %vm565 = vc.u32 %v559, %v561
        %v566 = vadd.s32 %v562, 1
        %v567 = vsel %vm565, %v566, %v562
        %v568 = vadd.s32 %v563, %v567
        %v569 = vadd.s32 %v568, 536870912
        %v570 = vshrl.u32 %v569, 30
        %v571 = vshll.u32 %v570, 30
        %v572 = vsub.s32 %v568, %v571
        %vm573 = vcmp.lt.s32.totalorder %v572, 0
        %v574 = vsub.s32 0, %v572
        %v575 = vsel %vm573, %v574, %v572
        %v576 = vclz %v575
        %v577 = vsub.s32 %v576, 2
        %vm578 = vcmp.gt.s32.totalorder 0, %v577
        %v579 = vsel %vm578, 0, %v577
        %v580 = vsub.s32 32, %v579
        %v581 = vshll.u32 %v572, %v579
        %v582 = vshrl.u32 %v564, %v580
        %v583 = vor.u32 %v581, %v582
        %v584 = vsub.s32 4294967266, %v579
        %v585 = vadd.s32 %v584, 127
        %v586 = vshll.u32 %v585, 23
        %v587 = vor.u32 4788187, %v586
        %v588 = vand.u32 2147483647, %v587
        %v590 = vcvt.s32.f32 %v583
        %v591 = vmul.f32 %v590, %v588
        %v592 = vxor.u32 %v591, 2147483648
        %v593 = vsel %vm510, %v592, %v591
        %v594 = vsub.s32 4, %v570
        %v595 = vsel %vm510, %v594, %v570
        %v596 = vsel %vm509, %v404, %v593
        %v597 = vsel %vm509, 0, %v595
        %v598 = vcosq.f32.pop %v596
        %v599 = vsinq.f32.pop %v596
        %vm600 = vweird.f32 %v404
        %v601 = vadd.s32 %v597, 3
        %v602 = vand.u32 %v601, 3
        %vm603 = vcmp.lt.s32.totalorder %v602, 2
        %vm604 = vcmp.eq.s32.totalorder %v602, 0
        %v605 = vxor.u32 %v599, 2147483648
        %v606 = vsel %vm604, %v598, %v605
        %vm607 = vcmp.eq.s32.totalorder %v602, 2
        %v608 = vxor.u32 %v598, 2147483648
        %v609 = vsel %vm607, %v608, %v599
        %v610 = vsel %vm603, %v606, %v609
        %v611 = vsel %vm600, nan, %v610
        %v613 = vlaneseq
        %v614 = vshrl.u32 %v613, 7
        %v615 = vsub.s32 0, %v614
        %v616 = vrot.slane %v400, %v615
        %v618 = vmul.f32 %v616, %v507
        %v620 = vlaneseq
        %v621 = vshrl.u32 %v620, 7
        %v622 = vsub.s32 0, %v621
        %v623 = vrot.slane %v401, %v622
        %v625 = vmul.f32 %v623, %v611
        %v626 = vadd.f32 %v618, %v625
        %v627 = vsub.f32 0.0, %v400
        %v629 = vlaneseq
        %v630 = vshrl.u32 %v629, 7
        %v631 = vsub.s32 0, %v630
        %v632 = vrot.slane %v627, %v631
        %v634 = vmul.f32 %v632, %v611
        %v635 = vmul.f32 %v623, %v507
        %v636 = vadd.f32 %v634, %v635
        %v637 = vmul.f32 %v626, %v626
        %v638 = vmul.f32 %v395, %v395
        %v639 = vrcp.pop %v638
        %v640 = vmul.f32 %v637, %v639
        %v641 = vmul.f32 %v636, %v636
        %v642 = vmul.f32 %v403, %v403
        %v643 = vrcp.pop %v642
        %v644 = vmul.f32 %v641, %v643
        %v645 = vadd.f32 %v640, %v644
        %v646 = vmul.f32 %v645, -0.5
        %v647 = vmul.f32 %v646, 1.442695
        %v648 = vpow.pop %v647
        %v649 = vmul.f32 %v395, 6.2831855
        %v650 = vmul.f32 %v649, %v403
        %v651 = vrcp.pop %v650
        %v652 = vmul.f32 %v648, %v651
        %v653 = vrcp.pop %v397
        %v654 = vmul.f32 6.2831855, %v653
        %v655 = vmul.f32 %v654, %v626
        %v656 = vadd.f32 %v655, %v399
        %v657 = vand.u32 2147483647, %v656
        %vm658 = vcmp.le.f32.partialorder %v657, 0.7853982
        %vm659 = vcmp.lt.s32.totalorder %v656, 0
        %v660 = vand.u32 %v656, 2139095040
        %v661 = vshrl.u32 %v660, 23
        %v662 = vsub.s32 %v661, 127
        %v663 = vand.u32 2147483647, %v656
        %v664 = vand.u32 %v663, 8388607
        %v665 = vor.u32 %v664, 8388608
        %v666 = vsub.s32 0, %v665
        %v667 = vadd.s32 %v662, 1
        %vm668 = vcmp.gt.s32.totalorder %v667, 0
        %v669 = vsel %vm668, %v667, 0
        %v670 = vshrl.u32 %v669, 5
        %v671 = vand.u32 %v669, 31
        %v672 = vsub.s32 32, %v671
        %v673 = vshrl.u32 683565275, %v672
        %v674 = vshll.u32 683565275, %v671
        %v675 = vshrl.u32 2475754826, %v672
        %v676 = vor.u32 %v674, %v675
        %v677 = vshll.u32 2475754826, %v671
        %v678 = vshrl.u32 2131351028, %v672
        %v679 = vor.u32 %v677, %v678
        %v680 = vshll.u32 2131351028, %v671
        %v681 = vshrl.u32 2102212464, %v672
        %v682 = vor.u32 %v680, %v681
        %v683 = vshll.u32 2102212464, %v671
        %v684 = vshrl.u32 920167782, %v672
        %v685 = vor.u32 %v683, %v684
        %v686 = vshll.u32 920167782, %v671
        %v687 = vshrl.u32 1326507024, %v672
        %v688 = vor.u32 %v686, %v687
        %vm689 = vcmp.lt.s32.totalorder %v670, 1
        %vm690 = vcmp.lt.s32.totalorder %v670, 2
        %vm691 = vcmp.lt.s32.totalorder %v670, 3
        %vm692 = vcmp.lt.s32.totalorder %v670, 4
        %v693 = vsel %vm689, %v673, %v676
        %v694 = vsel %vm692, %v682, 2102212464
        %v695 = vsel %vm691, %v679, %v694
        %v696 = vsel %vm690, %v693, %v695
        %v697 = vsel %vm689, %v676, %v679
        %v698 = vsel %vm692, %v685, 920167782
        %v699 = vsel %vm691, %v682, %v698
        %v700 = vsel %vm690, %v697, %v699
        %v701 = vsel %vm689, %v679, %v682
        %v702 = vsel %vm692, %v688, 1326507024
        %v703 = vsel %vm691, %v685, %v702
        %v704 = vsel %vm690, %v701, %v703
        %v705 = vshll.u32 %v665, 8
        %v706 = vmul.u32.u64.compose %v705, %v704
        %v707 = vextract.low.u32 %v706
        %v708 = vextract.high.u32 %v706
        %v709 = vmul.u32.u64.compose %v705, %v700
        %v710 = vextract.low.u32 %v709
        %v711 = vextract.high.u32 %v709
        %v712 = vmul.u32 %v705, %v696
        %v713 = vadd.s32 %v708, %v710
        %vm714 = vc.u32 %v708, %v710
        %v715 = vadd.s32 %v711, 1
        %v716 = vsel %vm714, %v715, %v711
        %v717 = vadd.s32 %v712, %v716
        %v718 = vadd.s32 %v717, 536870912
        %v719 = vshrl.u32 %v718, 30
        %v720 = vshll.u32 %v719, 30
        %v721 = vsub.s32 %v717, %v720
        %vm722 = vcmp.lt.s32.totalorder %v721, 0
        %v723 = vsub.s32 0, %v721
        %v724 = vsel %vm722, %v723, %v721
        %v725 = vclz %v724
        %v726 = vsub.s32 %v725, 2
        %vm727 = vcmp.gt.s32.totalorder 0, %v726
        %v728 = vsel %vm727, 0, %v726
        %v729 = vsub.s32 32, %v728
        %v730 = vshll.u32 %v721, %v728
        %v731 = vshrl.u32 %v713, %v729
        %v732 = vor.u32 %v730, %v731
        %v733 = vsub.s32 4294967266, %v728
        %v734 = vadd.s32 %v733, 127
        %v735 = vshll.u32 %v734, 23
        %v736 = vor.u32 4788187, %v735
        %v737 = vand.u32 2147483647, %v736
        %v739 = vcvt.s32.f32 %v732
        %v740 = vmul.f32 %v739, %v737
        %v741 = vxor.u32 %v740, 2147483648
        %v742 = vsel %vm659, %v741, %v740
        %v743 = vsub.s32 4, %v719
        %v744 = vsel %vm659, %v743, %v719
        %v745 = vsel %vm658, %v656, %v742
        %v746 = vsel %vm658, 0, %v744
        %v747 = vcosq.f32.pop %v745
        %v748 = vsinq.f32.pop %v745
        %vm749 = vweird.f32 %v656
        %v750 = vand.u32 %v746, 3
        %vm751 = vcmp.lt.s32.totalorder %v750, 2
        %vm752 = vcmp.eq.s32.totalorder %v750, 0
        %v753 = vxor.u32 %v748, 2147483648
        %v754 = vsel %vm752, %v747, %v753
        %vm755 = vcmp.eq.s32.totalorder %v750, 2
        %v756 = vxor.u32 %v747, 2147483648
        %v757 = vsel %vm755, %v756, %v748
        %v758 = vsel %vm751, %v754, %v757
        %v759 = vsel %vm749, nan, %v758
        %v760 = vmul.f32 %v652, %v759
        %v761 = vpack.c.bf16 %v760, %v760
        %v762 = vld [vmem:[%s8] sm:$0xff]
        %v763 = vld [vmem:[%s393] sm:$0x3f]
        %v765 = vcombine.high %v763, %v763
        %v767 = vunpack.c.l.s4 1983009808
        %v768 = vunpack.c.0.s8 %v767
        %v769 = vlaneseq
        %v770 = vshrl.u32 %v769, 7
        %v771 = vsub.s32 %v768, %v770
        %v772 = vrot.slane %v763, %v771
        %v774 = vunpack.c.l.s4 1983009808
        %v775 = vunpack.c.0.s8 %v774
        %v776 = vlaneseq
        %v777 = vshrl.u32 %v776, 7
        %v778 = vsub.s32 %v775, %v777
        %v779 = vrot.slane %v765, %v778
        %782 = vst [vmem:[#allocation2] sm:$0x33] %v772
        %vm783 = vcmask 254976
        %784 = vst.msk [vmem:[#allocation2 + $0x8] sm:$0x3] %vm783, %v779
        %v785 = vld [vmem:[%s393] sm:$0x3f]
        %v787 = vcombine.low %v785, %v785
        %v789 = vunpack.c.l.s4 1983009808
        %v790 = vunpack.c.0.s8 %v789
        %v791 = vlaneseq
        %v792 = vshrl.u32 %v791, 7
        %v793 = vsub.s32 %v790, %v792
        %v794 = vrot.slane %v787, %v793
        %v796 = vunpack.c.l.s4 1983009808
        %v797 = vunpack.c.0.s8 %v796
        %v798 = vlaneseq
        %v799 = vshrl.u32 %v798, 7
        %v800 = vsub.s32 %v797, %v799
        %v801 = vrot.slane %v785, %v800
        %802 = vrot.lane.b32.xlu0 %v794, 127
        %v803 = vpop.permute.xlu0 %802
        %804 = vrot.lane.b32.xlu0 %v801, 127
        %v805 = vpop.permute.xlu0 %804
        %v806 = vrot.slane %v803, 4
        %v807 = vrot.slane %v805, 4
        %vm808 = vcmask 1043456
        %v809 = vsel %vm808, %v806, %v807
        %vm810 = vcmask 1039360
        %v811 = vsel %vm810, %v803, %v809
        %814 = vst [vmem:[#allocation2] sm:$0xcc] %v811
        %vm815 = vcmask 257026
        %816 = vst.msk [vmem:[#allocation2 + $0x8] sm:$0xc] %vm815, %v805
        %v817 = vld [vmem:[%s393] sm:$0x3f]
        %v819 = vcombine.high %v817, %v817
        %v821 = vunpack.c.l.s4 1983009808
        %v822 = vunpack.c.0.s8 %v821
        %v823 = vlaneseq
        %v824 = vshrl.u32 %v823, 7
        %v825 = vsub.s32 %v822, %v824
        %v826 = vrot.slane %v817, %v825
        %v828 = vunpack.c.l.s4 1983009808
        %v829 = vunpack.c.0.s8 %v828
        %v830 = vlaneseq
        %v831 = vshrl.u32 %v830, 7
        %v832 = vsub.s32 %v829, %v831
        %v833 = vrot.slane %v819, %v832
        %834 = vrot.lane.b32.xlu0 %v826, 126
        %v835 = vpop.permute.xlu0 %834
        %836 = vrot.lane.b32.xlu0 %v833, 126
        %v837 = vpop.permute.xlu0 %836
        %v838 = vrot.slane %v835, 4
        %v839 = vrot.slane %v837, 4
        %v840 = vsel %vm808, %v838, %v839
        %vm841 = vcmask 1031168
        %v842 = vsel %vm841, %v835, %v840
        %845 = vst [vmem:[#allocation2 + $0xc] sm:$0x33] %v842
        %846 = vst.msk [vmem:[#allocation2 + $0x14] sm:$0x3] %vm783, %v837
        %v847 = vld [vmem:[%s393] sm:$0x3f]
        %v849 = vcombine.low %v847, %v847
        %v851 = vunpack.c.l.s4 1983009808
        %v852 = vunpack.c.0.s8 %v851
        %v853 = vlaneseq
        %v854 = vshrl.u32 %v853, 7
        %v855 = vsub.s32 %v852, %v854
        %v856 = vrot.slane %v849, %v855
        %v858 = vunpack.c.l.s4 1983009808
        %v859 = vunpack.c.0.s8 %v858
        %v860 = vlaneseq
        %v861 = vshrl.u32 %v860, 7
        %v862 = vsub.s32 %v859, %v861
        %v863 = vrot.slane %v847, %v862
        %864 = vrot.lane.b32.xlu0 %v856, 110
        %v865 = vpop.permute.xlu0 %864
        %866 = vrot.lane.b32.xlu0 %v863, 110
        %v867 = vpop.permute.xlu0 %866
        %v868 = vrot.slane %v865, 4
        %v869 = vrot.slane %v867, 4
        %v870 = vsel %vm808, %v868, %v869
        %vm871 = vcmask 900096
        %v872 = vsel %vm871, %v865, %v870
        %875 = vst [vmem:[#allocation2 + $0xc] sm:$0xcc] %v872
        %876 = vst.msk [vmem:[#allocation2 + $0x14] sm:$0xc] %vm815, %v867
        %v877 = vld [vmem:[%s393] sm:$0x3f]
        %v879 = vcombine.high %v877, %v877
        %v881 = vunpack.c.l.s4 1983009808
        %v882 = vunpack.c.0.s8 %v881
        %v883 = vlaneseq
        %v884 = vshrl.u32 %v883, 7
        %v885 = vsub.s32 %v882, %v884
        %v886 = vrot.slane %v877, %v885
        %v888 = vunpack.c.l.s4 1983009808
        %v889 = vunpack.c.0.s8 %v888
        %v890 = vlaneseq
        %v891 = vshrl.u32 %v890, 7
        %v892 = vsub.s32 %v889, %v891
        %v893 = vrot.slane %v879, %v892
        %894 = vrot.lane.b32.xlu0 %v886, 109
        %v895 = vpop.permute.xlu0 %894
        %896 = vrot.lane.b32.xlu0 %v893, 109
        %v897 = vpop.permute.xlu0 %896
        %v898 = vrot.slane %v895, 4
        %v899 = vrot.slane %v897, 4
        %v900 = vsel %vm808, %v898, %v899
        %vm901 = vcmask 891904
        %v902 = vsel %vm901, %v895, %v900
        %905 = vst [vmem:[#allocation2 + $0x18] sm:$0x33] %v902
        %906 = vst.msk [vmem:[#allocation2 + $0x20] sm:$0x3] %vm783, %v897
        %v907 = vld [vmem:[%s393] sm:$0x3f]
        %v909 = vcombine.low %v907, %v907
        %v911 = vunpack.c.l.s4 1983009808
        %v912 = vunpack.c.0.s8 %v911
        %v913 = vlaneseq
        %v914 = vshrl.u32 %v913, 7
        %v915 = vsub.s32 %v912, %v914
        %v916 = vrot.slane %v909, %v915
        %v918 = vunpack.c.l.s4 1983009808
        %v919 = vunpack.c.0.s8 %v918
        %v920 = vlaneseq
        %v921 = vshrl.u32 %v920, 7
        %v922 = vsub.s32 %v919, %v921
        %v923 = vrot.slane %v907, %v922
        %924 = vrot.lane.b32.xlu0 %v916, 108
        %v925 = vpop.permute.xlu0 %924
        %926 = vrot.lane.b32.xlu0 %v923, 108
        %v927 = vpop.permute.xlu0 %926
        %v928 = vrot.slane %v925, 4
        %v929 = vrot.slane %v927, 4
        %v930 = vsel %vm808, %v928, %v929
        %vm931 = vcmask 883712
        %v932 = vsel %vm931, %v925, %v930
        %935 = vst [vmem:[#allocation2 + $0x18] sm:$0xcc] %v932
        %936 = vst.msk [vmem:[#allocation2 + $0x20] sm:$0xc] %vm815, %v927
        %v937 = vld [vmem:[%s393] sm:$0x3f]
        %v939 = vcombine.high %v937, %v937
        %v941 = vunpack.c.l.s4 1983009808
        %v942 = vunpack.c.0.s8 %v941
        %v943 = vlaneseq
        %v944 = vshrl.u32 %v943, 7
        %v945 = vsub.s32 %v942, %v944
        %v946 = vrot.slane %v937, %v945
        %v948 = vunpack.c.l.s4 1983009808
        %v949 = vunpack.c.0.s8 %v948
        %v950 = vlaneseq
        %v951 = vshrl.u32 %v950, 7
        %v952 = vsub.s32 %v949, %v951
        %v953 = vrot.slane %v939, %v952
        %954 = vrot.lane.b32.xlu0 %v946, 92
        %v955 = vpop.permute.xlu0 %954
        %956 = vrot.lane.b32.xlu0 %v953, 92
        %v957 = vpop.permute.xlu0 %956
        %v958 = vrot.slane %v955, 4
        %v959 = vrot.slane %v957, 4
        %v960 = vsel %vm808, %v958, %v959
        %vm961 = vcmask 752640
        %v962 = vsel %vm961, %v955, %v960
        %965 = vst [vmem:[#allocation2 + $0x24] sm:$0x33] %v962
        %966 = vst.msk [vmem:[#allocation2 + $0x2c] sm:$0x3] %vm783, %v957
        %v967 = vld [vmem:[%s393] sm:$0x3f]
        %v969 = vcombine.low %v967, %v967
        %v971 = vunpack.c.l.s4 1983009808
        %v972 = vunpack.c.0.s8 %v971
        %v973 = vlaneseq
        %v974 = vshrl.u32 %v973, 7
        %v975 = vsub.s32 %v972, %v974
        %v976 = vrot.slane %v969, %v975
        %v978 = vunpack.c.l.s4 1983009808
        %v979 = vunpack.c.0.s8 %v978
        %v980 = vlaneseq
        %v981 = vshrl.u32 %v980, 7
        %v982 = vsub.s32 %v979, %v981
        %v983 = vrot.slane %v967, %v982
        %984 = vrot.lane.b32.xlu0 %v976, 91
        %v985 = vpop.permute.xlu0 %984
        %986 = vrot.lane.b32.xlu0 %v983, 91
        %v987 = vpop.permute.xlu0 %986
        %v988 = vrot.slane %v985, 4
        %v989 = vrot.slane %v987, 4
        %v990 = vsel %vm808, %v988, %v989
        %vm991 = vcmask 744448
        %v992 = vsel %vm991, %v985, %v990
        %995 = vst [vmem:[#allocation2 + $0x24] sm:$0xcc] %v992
        %996 = vst.msk [vmem:[#allocation2 + $0x2c] sm:$0xc] %vm815, %v987
        %v997 = vld [vmem:[%s393] sm:$0x3f]
        %v999 = vcombine.high %v997, %v997
        %v1001 = vunpack.c.l.s4 1983009808
        %v1002 = vunpack.c.0.s8 %v1001
        %v1003 = vlaneseq
        %v1004 = vshrl.u32 %v1003, 7
        %v1005 = vsub.s32 %v1002, %v1004
        %v1006 = vrot.slane %v997, %v1005
        %v1008 = vunpack.c.l.s4 1983009808
        %v1009 = vunpack.c.0.s8 %v1008
        %v1010 = vlaneseq
        %v1011 = vshrl.u32 %v1010, 7
        %v1012 = vsub.s32 %v1009, %v1011
        %v1013 = vrot.slane %v999, %v1012
        %1014 = vrot.lane.b32.xlu0 %v1006, 90
        %v1015 = vpop.permute.xlu0 %1014
        %1016 = vrot.lane.b32.xlu0 %v1013, 90
        %v1017 = vpop.permute.xlu0 %1016
        %v1018 = vrot.slane %v1015, 4
        %v1019 = vrot.slane %v1017, 4
        %v1020 = vsel %vm808, %v1018, %v1019
        %vm1021 = vcmask 736256
        %v1022 = vsel %vm1021, %v1015, %v1020
        %1025 = vst [vmem:[#allocation2 + $0x30] sm:$0x33] %v1022
        %1026 = vst.msk [vmem:[#allocation2 + $0x38] sm:$0x3] %vm783, %v1017
        %v1027 = vld [vmem:[#allocation2] sm:$0xff]
        %v1028 = vld [vmem:[#allocation2 + $0x8] sm:$0xf]
        %v1029 = vld [vmem:[#allocation2 + $0xc] sm:$0xff]
        %v1030 = vld [vmem:[#allocation2 + $0x14] sm:$0xf]
        %v1031 = vld [vmem:[#allocation2 + $0x18] sm:$0xff]
        %v1032 = vld [vmem:[#allocation2 + $0x20] sm:$0xf]
        %v1033 = vld [vmem:[#allocation2 + $0x24] sm:$0xff]
        %v1034 = vld [vmem:[#allocation2 + $0x2c] sm:$0xf]
        %v1035 = vld [vmem:[#allocation2 + $0x30] sm:$0x33]
        %v1036 = vld [vmem:[#allocation2 + $0x38] sm:$0x3]
        %1038 = vset.pattern.permute.xlu0 0
        %1039 = vperm.xlu0 %1038, %v762
        %v1040 = vpop.permute.xlu0 %1039
        %v1052 = vunpack.c.l.b16 %v1027
        %v1053 = vunpack.c.h.b16 %v1027
        %v1054 = vunpack.c.l.b16 %v1028
        %v1055 = vunpack.c.l.b16 %v1029
        %v1056 = vunpack.c.h.b16 %v1029
        %v1057 = vunpack.c.l.b16 %v1030
        %v1058 = vunpack.c.l.b16 %v1031
        %v1059 = vunpack.c.h.b16 %v1031
        %v1060 = vunpack.c.l.b16 %v1032
        %v1061 = vunpack.c.l.b16 %v1033
        %v1062 = vunpack.c.h.b16 %v1033
        %v1063 = vunpack.c.l.b16 %v1034
        %v1064 = vunpack.c.l.b16 %v1035
        %v1065 = vunpack.c.h.b16 %v1035
        %v1066 = vunpack.c.l.b16 %v1036
        %v1067 = vpack.c.b16 %v1055, %v1052
        %v1068 = vpack.c.b16 %v1056, %v1053
        %v1069 = vpack.c.b16 %v1057, %v1054
        %v1070 = vpack.c.b16 %v1061, %v1058
        %v1071 = vpack.c.b16 %v1062, %v1059
        %v1072 = vpack.c.b16 %v1063, %v1060
        %v1073 = vpack.c.b16 %v1064, %v1064
        %v1074 = vpack.c.b16 %v1065, %v1065
        %v1075 = vpack.c.b16 %v1066, %v1066
        %vm1082 = vcmask 293888
        %v1084 = vsel %vm1082, %v761, 0
        %vm1086 = vcmask 1041408
        %v1088 = vsel %vm1086, %v1073, 0
        %v1091 = vsel %vm1086, %v1074, 0
        %v1094 = vsel %vm1086, %v1075, 0
        %1096 = vmatprep.subr.bf16.mxu0 0
        %1097 = vmatpush1.bf16.msra.mxu0 0
        %1098 = vmatprep.subr.bf16.mxu0 0
        %1099 = vmatpush1.bf16.msra.mxu0 0
        %1100 = vmatprep.subr.bf16.mxu0 0
        %1101 = vmatpush1.bf16.msra.mxu0 0
        %1102 = vmatprep.subr.bf16.mxu0 0
        %1103 = vmatpush1.bf16.msra.mxu0 0
        %1104 = vmatprep.subr.bf16.mxu0 0
        %1105 = vmatpush1.bf16.msra.mxu0 0
        %1106 = vmatprep.subr.bf16.mxu0 %v1091
        %1107 = vmatpush1.bf16.msra.mxu0 %v1088
        %1108 = vmatprep.subr.bf16.mxu0 %v1071
        %1109 = vmatpush1.bf16.msra.mxu0 %v1070
        %1110 = vmatprep.subr.bf16.mxu0 %v1068
        %1111 = vmatpush1.bf16.msra.mxu0 %v1067
        %1112 = vmatprep.subr.bf16.mxu0 0
        %1113 = vmatpush2.bf16.msra.mxu0 0
        %1114 = vmatprep.subr.bf16.mxu0 0
        %1115 = vmatpush2.bf16.msra.mxu0 0
        %1116 = vmatprep.subr.bf16.mxu0 0
        %1117 = vmatpush2.bf16.msra.mxu0 0
        %1118 = vmatprep.subr.bf16.mxu0 0
        %1119 = vmatpush2.bf16.msra.mxu0 0
        %1120 = vmatprep.subr.bf16.mxu0 0
        %1121 = vmatpush2.bf16.msra.mxu0 0
        %1122 = vmatprep.subr.bf16.mxu0 0
        %1123 = vmatpush2.bf16.msra.mxu0 0
        %1124 = vmatprep.subr.bf16.mxu0 0
        %1125 = vmatpush2.bf16.msra.mxu0 0
        %1126 = vmatprep.subr.bf16.mxu0 0
        %1127 = vmatpush2.bf16.msra.mxu0 0
        %1128 = vmatprep.mubr.bf16.mxu0 0
        %1129 = vmatmul.mubr.bf16.gmra.mxu0 %v1084
        %v1130 = vpop.f32.mrf.mxu0
        %v1131 = vadd.f32 %v1040, %v1130
        %v1132 = vpop.f32.mrf.mxu0
        %v1133 = vadd.f32 %v1040, %v1132
        %v1134 = vpop.f32.mrf.mxu0
        %v1135 = vpop.f32.mrf.mxu0
        %1136 = vdwg.mxu0
        %1137 = vmatprep.subr.bf16.mxu0 0
        %1138 = vmatpush1.bf16.msra.mxu0 0
        %1139 = vmatprep.subr.bf16.mxu0 0
        %1140 = vmatpush1.bf16.msra.mxu0 0
        %1141 = vmatprep.subr.bf16.mxu0 0
        %1142 = vmatpush1.bf16.msra.mxu0 0
        %1143 = vmatprep.subr.bf16.mxu0 0
        %1144 = vmatpush1.bf16.msra.mxu0 0
        %1145 = vmatprep.subr.bf16.mxu0 0
        %1146 = vmatpush1.bf16.msra.mxu0 0
        %1147 = vmatprep.subr.bf16.mxu0 0
        %1148 = vmatpush1.bf16.msra.mxu0 %v1094
        %1149 = vmatprep.subr.bf16.mxu0 0
        %1150 = vmatpush1.bf16.msra.mxu0 %v1072
        %1151 = vmatprep.subr.bf16.mxu0 0
        %1152 = vmatpush1.bf16.msra.mxu0 %v1069
        %1153 = vmatprep.subr.bf16.mxu0 0
        %1154 = vmatpush2.bf16.msra.mxu0 0
        %1155 = vmatprep.subr.bf16.mxu0 0
        %1156 = vmatpush2.bf16.msra.mxu0 0
        %1157 = vmatprep.subr.bf16.mxu0 0
        %1158 = vmatpush2.bf16.msra.mxu0 0
        %1159 = vmatprep.subr.bf16.mxu0 0
        %1160 = vmatpush2.bf16.msra.mxu0 0
        %1161 = vmatprep.subr.bf16.mxu0 0
        %1162 = vmatpush2.bf16.msra.mxu0 0
        %1163 = vmatprep.subr.bf16.mxu0 0
        %1164 = vmatpush2.bf16.msra.mxu0 0
        %1165 = vmatprep.subr.bf16.mxu0 0
        %1166 = vmatpush2.bf16.msra.mxu0 0
        %1167 = vmatprep.subr.bf16.mxu0 0
        %1168 = vmatpush2.bf16.msra.mxu0 0
        %1169 = vmatprep.mubr.bf16.mxu0 0
        %1170 = vmatmul.mubr.bf16.gmra.mxu0 %v1084
        %v1171 = vpop.f32.mrf.mxu0
        %v1172 = vadd.f32 %v1040, %v1171
        %v1173 = vpop.f32.mrf.mxu0
        %v1174 = vpop.f32.mrf.mxu0
        %v1175 = vpop.f32.mrf.mxu0
        %1176 = vdwg.mxu0
        %vm1177 = vcmask 130048
        %1178 = vst.msk [vmem:[%s388] sm:$0xff] %vm1177, %v1131
        %1180 = vrot.lane.b32.xlu0 %v1131, 126
        %v1181 = vpop.permute.xlu0 %1180
        %vm1183 = vcmask 261248
        %1184 = vst.msk [vmem:[%s388] sm:$0xff] %vm1183, %v1181
        %1185 = vrot.lane.b32.xlu0 %v1131, 124
        %v1186 = vpop.permute.xlu0 %1185
        %vm1188 = vcmask 392448
        %1189 = vst.msk [vmem:[%s388] sm:$0xff] %vm1188, %v1186
        %1190 = vrot.lane.b32.xlu0 %v1131, 122
        %v1191 = vpop.permute.xlu0 %1190
        %vm1193 = vcmask 523648
        %1194 = vst.msk [vmem:[%s388] sm:$0xff] %vm1193, %v1191
        %1195 = vrot.lane.b32.xlu0 %v1131, 120
        %v1196 = vpop.permute.xlu0 %1195
        %vm1198 = vcmask 654848
        %1199 = vst.msk [vmem:[%s388] sm:$0xff] %vm1198, %v1196
        %1200 = vrot.lane.b32.xlu0 %v1131, 118
        %v1201 = vpop.permute.xlu0 %1200
        %vm1203 = vcmask 786048
        %1204 = vst.msk [vmem:[%s388] sm:$0xff] %vm1203, %v1201
        %1205 = vrot.lane.b32.xlu0 %v1131, 116
        %v1206 = vpop.permute.xlu0 %1205
        %vm1208 = vcmask 917248
        %1209 = vst.msk [vmem:[%s388] sm:$0xff] %vm1208, %v1206
        %1211 = vrot.lane.b32.xlu0 %v1131, 114
        %v1212 = vpop.permute.xlu0 %1211
        %1213 = vrot.lane.b32.xlu0 %v1133, 114
        %v1214 = vpop.permute.xlu0 %1213
        %vm1215 = vcmask 932864
        %v1216 = vsel %vm1215, %v1212, %v1214
        %vm1218 = vcmask 1048448
        %1219 = vst.msk [vmem:[%s388] sm:$0xff] %vm1218, %v1216
        %1220 = vrot.lane.b32.xlu0 %v1133, 112
        %v1221 = vpop.permute.xlu0 %1220
        %1223 = vst.msk [vmem:[%s388 + $0x8] sm:$0xff] %vm1177, %v1221
        %1224 = vrot.lane.b32.xlu0 %v1133, 110
        %v1225 = vpop.permute.xlu0 %1224
        %1227 = vst.msk [vmem:[%s388 + $0x8] sm:$0xff] %vm1183, %v1225
        %1228 = vrot.lane.b32.xlu0 %v1133, 108
        %v1229 = vpop.permute.xlu0 %1228
        %1231 = vst.msk [vmem:[%s388 + $0x8] sm:$0xff] %vm1188, %v1229
        %1232 = vrot.lane.b32.xlu0 %v1133, 106
        %v1233 = vpop.permute.xlu0 %1232
        %1235 = vst.msk [vmem:[%s388 + $0x8] sm:$0xff] %vm1193, %v1233
        %1236 = vrot.lane.b32.xlu0 %v1133, 104
        %v1237 = vpop.permute.xlu0 %1236
        %1239 = vst.msk [vmem:[%s388 + $0x8] sm:$0xff] %vm1198, %v1237
        %1240 = vrot.lane.b32.xlu0 %v1133, 102
        %v1241 = vpop.permute.xlu0 %1240
        %1243 = vst.msk [vmem:[%s388 + $0x8] sm:$0xff] %vm1203, %v1241
        %1245 = vrot.lane.b32.xlu0 %v1133, 100
        %v1246 = vpop.permute.xlu0 %1245
        %1247 = vrot.lane.b32.xlu0 %v1172, 100
        %v1248 = vpop.permute.xlu0 %1247
        %vm1249 = vcmask 818176
        %v1250 = vsel %vm1249, %v1246, %v1248
        %1252 = vst.msk [vmem:[%s388 + $0x8] sm:$0xff] %vm1208, %v1250
        %1253 = vrot.lane.b32.xlu0 %v1172, 98
        %v1254 = vpop.permute.xlu0 %1253
        %1256 = vst.msk [vmem:[%s388 + $0x8] sm:$0xff] %vm1218, %v1254
        %s1257 = sand.u32 %s228, 1
        %s1258 = scalar_lea.sflag [#allocation5], %s1257
        %s1259 = sand.u32 %s228, 1
        %s1260 = smul.addr %s1259, 16
        %s1261 = scalar_lea.vmem [#allocation12], %s1260
        // Predicated region
        $region77: #{tpu_custom_call.1} parent=55 // pred_check
          %p1262 = pneg %p238
        $region78: #{tpu_custom_call.1} parent=55 // pred_check_branch
          %1264 = sbr.rel (%p1262) target = $region80
        $region79: #{tpu_custom_call.1} parent=55 // pred_region
          %s1266 = ssub.s32 256, 256
          %1267 = vsyncadd %s1258, %s1266
          %s1268 = smul.addr %s26, 2
          %s1269 = smul.addr %s1268, 128
          %s1270 = scalar_lea.hbm %s9, %s1269
          %s1272 = sshll.u32 %s1261, 4
          %s1273 = int_to_ptr.vmem [resolvable:$true] %s1272
          %1275 = dma.vmem_to_hbm [thread:$0]  %s1273, 256, %s1270, %s1258
        $region80: #{tpu_custom_call.1} parent=55 // pred_fallthru
          _
      $region56: #{tpu_custom_call.1} parent=5 // pred_fallthru
        _
      %p1276 = scmp.le.s32.totalorder 2, %s21
      // Predicated region
      $region81: #{tpu_custom_call.1} parent=5 // pred_check
        %p1277 = pneg %p1276
      $region82: #{tpu_custom_call.1} parent=5 // pred_check_branch
        %1279 = sbr.rel (%p1277) target = $region84
      $region83: #{tpu_custom_call.1} parent=5 // pred_region
        %s1280 = ssub.s32 %s21, 2
        // Predicated region
        $region85: #{tpu_custom_call.1} parent=83 // pred_check
          %p1281 = pneg %p244
        $region86: #{tpu_custom_call.1} parent=83 // pred_check_branch
          %1283 = sbr.rel (%p1281) target = $region88
        $region87: #{tpu_custom_call.1} parent=83 // pred_region
          %s1284 = sand.u32 %s229, 1
          %s1285 = scalar_lea.sflag [#allocation5], %s1284
          %s1286 = sand.u32 %s229, 1
          %s1287 = smul.addr %s1286, 16
          %s1288 = scalar_lea.vmem [#allocation12], %s1287
          %1289 = dma.done %s1285, 256
        $region88: #{tpu_custom_call.1} parent=83 // pred_fallthru
          _
      $region84: #{tpu_custom_call.1} parent=5 // pred_fallthru
        _
    $region6: #{tpu_custom_call.1} parent=1 // loop_footer
      %s25 = sadd.s32 1, %s21
    $region7: #{tpu_custom_call.1} parent=1 // loop_footer_branch
      %20 = sbr.rel target = $region3
    $region8: #{tpu_custom_call.1} parent=1 // loop_exit
      _
    %1290 = vsyncpa [#allocation4], 1
    %s1291 = scalar_lea.sflag [#allocation4], 1
    %1292 = vsyncpa %s1291, 1
    %1293 = vsyncpa [#allocation7], 1
    %1294 = vsyncpa [#allocation10], 1
    %1295 = vsyncpa [#allocation5], 1
    %s1296 = scalar_lea.sflag [#allocation5], 1
    %1297 = vsyncpa %s1296, 1

</llo_original>
